<compile_context>
chip_gen: v5e
topology: v5e:2x2
jax: 0.10.0
libtpu: 0.0.40
codegen_flags: <defaults>
</compile_context>

<pallas_src>
import jax
import jax.numpy as jnp
from jax.experimental import pallas as pl
from jax.experimental.pallas import tpu as pltpu


# ----------------------------------------------------------------------------
# Fused Pallas kernel: ReLU -> tconv (all 4 phases, one matmul) -> BN affine
# ----------------------------------------------------------------------------
def _block_up_kernel(x_ref, w_ref, shift_ref, o_ref):
    # x_ref:     (W+2, TH+2, Cin)   f32  padded input tile (width-major)
    # w_ref:     (9*Cin, 4*Cout)    bf16 phase-combined weight, BN scale folded
    # shift_ref: (1, 4*Cout)        f32  BN shift, tiled per phase
    # o_ref:     (2, 2, TH, W*Cout) f32  output phases, lane-dense last dim
    wp2, thp2, cin = x_ref.shape
    w_sz, th = wp2 - 2, thp2 - 2
    cout = o_ref.shape[3] // w_sz

    # ReLU once on the input tile (not on duplicated patches), in f32.
    xt = jnp.maximum(x_ref[...], 0.0)

    # In-VMEM im2col: the 3x3 padded patch around every (h, w).  Rows are
    # ordered w-major / h-minor so the lane-dense output assembly below needs
    # only contiguous slices + lane concatenation (no awkward relayouts).
    cols = []
    for a in range(3):              # h offset within the patch
        for b in range(3):          # w offset within the patch
            sl = xt[b:b + w_sz, a:a + th, :]             # (W, TH, Cin)
            cols.append(sl.reshape(w_sz * th, cin))      # collapse leading dims
    patches = jnp.concatenate(cols, axis=1)              # (W*TH, 9*Cin) f32
    patches = patches.astype(jnp.bfloat16)               # MXU-native operand

    # One MXU matmul produces all four phases; f32 accumulation.
    acc = jnp.dot(patches, w_ref[...], preferred_element_type=jnp.float32)
    acc = acc + shift_ref[...]                            # BN shift (scale in w)

    # Assemble each phase as a lane-dense (TH, W*Cout) slab and store it.
    for p, (py, px) in enumerate(((0, 0), (0, 1), (1, 0), (1, 1))):
        chunks = [acc[wi * th:(wi + 1) * th, p * cout:(p + 1) * cout]
                  for wi in range(w_sz)]
        o_ref[py, px, :, :] = jnp.concatenate(chunks, axis=1)


# ----------------------------------------------------------------------------
# Wrapper: weight/ BN folding, halo row-tiling, lane-dense -> NCHW unshuffle
# ----------------------------------------------------------------------------
def _pick_tile_h(h):
    # Whole image per grid step up to 64 rows; otherwise the largest divisor
    # of H that is a multiple of 8 (keeps the output block (8,128)-legal and
    # the input tile within the v7x VMEM budget).
    if h <= 64:
        return h
    for th in (64, 56, 48, 40, 32, 24, 16, 8):
        if h % th == 0:
            return th
    return h   # awkward H: fall back to one tile per batch element


@jax.jit
def block_up_forward(x_nchw, params):
    """Eval-mode forward of BlockUp. I/O layout: NCHW (like PyTorch)."""
    w_t = params["w_tconv"]                                 # (Cin, Cout, 4, 4)
    cin, cout = int(w_t.shape[0]), int(w_t.shape[1])
    n, cin_x, h, w = x_nchw.shape
    assert cin_x == cin

    # --- BatchNorm2d (eval) folded to per-channel scale / shift --------------
    eps = 1e-5
    scale = params["bn_gamma"] / jnp.sqrt(params["bn_var"] + eps)   # (Cout,)
    shift = params["bn_beta"] - params["bn_mean"] * scale           # (Cout,)

    # --- phase-combined tconv weight: (3,3,Cin,2,2,Cout) -> (9*Cin, 4*Cout) --
    # out[2h+py, 2w+px, co] =
    #   sum_{aa,bb,ci} x_pad[h+py+aa, w+px+bb, ci] * W[ci,co, 3-py-2aa, 3-px-2bb]
    wbig = jnp.zeros((3, 3, cin, 2, 2, cout), jnp.float32)
    for py in range(2):
        for px in range(2):
            for aa in range(2):
                for bb in range(2):
                    wbig = wbig.at[py + aa, px + bb, :, py, px, :].set(
                        w_t[:, :, 3 - py - 2 * aa, 3 - px - 2 * bb])
    wbig = wbig * scale[None, None, None, None, None, :]    # fold BN scale (f32)
    wbig = wbig.reshape(9 * cin, 4 * cout).astype(jnp.bfloat16)
    shift_row = jnp.tile(shift, 4).reshape(1, 4 * cout).astype(jnp.float32)

    # --- padded, width-major input + H row-tiles with a 2-row halo -----------
    xp = jnp.transpose(x_nchw, (0, 3, 2, 1))                # (N, W, H, Cin)
    xp = jnp.pad(xp, ((0, 0), (1, 1), (1, 1), (0, 0)))      # (N, W+2, H+2, Cin)
    th = _pick_tile_h(h)
    n_tiles = h // th
    slabs = jnp.stack([xp[:, :, t * th:t * th + th + 2, :]
                       for t in range(n_tiles)], axis=1)    # (N, T, W+2, TH+2, Cin)

    out = pl.pallas_call(
        _block_up_kernel,
        out_shape=jax.ShapeDtypeStruct((n, 2, 2, h, w * cout), jnp.float32),
        grid=(n, n_tiles),
        in_specs=[
            pl.BlockSpec((None, None, w + 2, th + 2, cin),
                         lambda i, t: (i, t, 0, 0, 0)),
            pl.BlockSpec((9 * cin, 4 * cout), lambda i, t: (0, 0)),
            pl.BlockSpec((1, 4 * cout), lambda i, t: (0, 0)),
        ],
        out_specs=pl.BlockSpec((None, 2, 2, th, w * cout),
                               lambda i, t: (i, 0, 0, t, 0)),
        compiler_params=pltpu.CompilerParams(
            dimension_semantics=("parallel", "parallel"),
            vmem_limit_bytes=32 * 1024 * 1024),
    )(slabs, wbig, shift_row)

    # --- de-interleave phases and return NCHW (cheap XLA transpose) ----------
    out = out.reshape(n, 2, 2, h, w, cout)                  # (n, py, px, h, w, co)
    out = jnp.transpose(out, (0, 5, 3, 1, 4, 2))            # (n, co, h, py, w, px)
    # Dropout2d(0.5) is identity in eval mode.
    return out.reshape(n, cout, 2 * h, 2 * w)


# ----------------------------------------------------------------------------
# Pure-JAX reference (for a numerical cross-check) + deterministic params
# ----------------------------------------------------------------------------
def block_up_reference(x_nchw, params, eps=1e-5):
    w_t = params["w_tconv"]                                 # (Cin, Cout, 4, 4)
    xr = jnp.maximum(x_nchw, 0.0)
    w_flip = jnp.transpose(w_t, (1, 0, 2, 3))[:, :, ::-1, ::-1]  # (Cout, Cin, 4, 4)
    y = jax.lax.conv_general_dilated(
        xr, w_flip, window_strides=(1, 1), padding=((2, 2), (2, 2)),
        lhs_dilation=(2, 2), rhs_dilation=(1, 1),
        dimension_numbers=("NCHW", "OIHW", "NCHW"))
    scale = params["bn_gamma"] / jnp.sqrt(params["bn_var"] + eps)
    shift = params["bn_beta"] - params["bn_mean"] * scale
    return y * scale[None, :, None, None] + shift[None, :, None, None]


def init_params(key, nb_feat_in, nb_feat_out):
    k1, k2, k3, k4, k5 = jax.random.split(key, 5)
    return {
        # ConvTranspose2d(nb_feat_in, nb_feat_out, 4, 4, bias=False): (Cin, Cout, kH, kW)
        "w_tconv": 0.1 * jax.random.normal(
            k1, (nb_feat_in, nb_feat_out, 4, 4), jnp.float32),
        # BatchNorm2d(nb_feat_out) affine params + running stats (eval mode)
        "bn_gamma": 1.0 + 0.1 * jax.random.normal(k2, (nb_feat_out,), jnp.float32),
        "bn_beta": 0.05 * jax.random.normal(k3, (nb_feat_out,), jnp.float32),
        "bn_mean": 0.1 * jax.random.normal(k4, (nb_feat_out,), jnp.float32),
        "bn_var": jax.random.uniform(k5, (nb_feat_out,), jnp.float32, 0.5, 1.5),
    }


if __name__ == "__main__":
    nb_feat_in, nb_feat_out = 4, 8          # BlockUp(nb_feat_in, nb_feat_out, use_dropout=True)
    n, h, w = 2, 16, 16

    key = jax.random.PRNGKey(0)
    kx, kp = jax.random.split(key)
    x = jax.random.normal(kx, (n, nb_feat_in, h, w), jnp.float32)   # NCHW
    params = init_params(kp, nb_feat_in, nb_feat_out)

    out = jax.block_until_ready(block_up_forward(x, params))
    assert out.shape == (n, nb_feat_out, 2 * h, 2 * w), out.shape
    assert out.dtype == jnp.float32

    # Cross-check against a pure-JAX reference (bf16 MXU operands -> loose tol).
    ref = jax.block_until_ready(block_up_reference(x, params))
    max_err = float(jnp.max(jnp.abs(out - ref)))
    assert max_err < 2e-2, max_err

    print("KERNEL_OK")
</pallas_src>

<mosaic_0001>
module attributes {stable_mosaic.version = 11 : i64} {
  func.func @_block_up_kernel(%arg0: i32, %arg1: i32, %arg2: memref<1x1x18x18x4xf32, #tpu.memory_space<vmem>>, %arg3: memref<36x32xbf16, #tpu.memory_space<vmem>>, %arg4: memref<1x32xf32, #tpu.memory_space<vmem>>, %arg5: memref<1x2x2x16x128xf32, #tpu.memory_space<vmem>>) attributes {dimension_semantics = [#tpu.dimension_semantics<parallel>, #tpu.dimension_semantics<parallel>], iteration_bounds = array<i64: 2, 1>, scalar_prefetch = 0 : i64, scratch_operands = 0 : i64, tpu.core_type = #tpu.core_type<tc>, window_params = [{transform_indices = @transform_0, window_bounds = array<i64: 1, 1, 18, 18, 4>}, {pipeline_mode = #tpu.pipeline_mode<synchronous>, transform_indices = @transform_1, window_bounds = array<i64: 36, 32>}, {pipeline_mode = #tpu.pipeline_mode<synchronous>, transform_indices = @transform_2, window_bounds = array<i64: 1, 32>}, {transform_indices = @transform_3, window_bounds = array<i64: 1, 2, 2, 16, 128>}]} {
    %c0 = arith.constant 0 : index
    %c0_0 = arith.constant 0 : index
    %c0_1 = arith.constant 0 : index
    %c0_2 = arith.constant 0 : index
    %c0_3 = arith.constant 0 : index
    %0 = vector.load %arg2[%c0, %c0_0, %c0_1, %c0_2, %c0_3] : memref<1x1x18x18x4xf32, #tpu.memory_space<vmem>>, vector<1x1x18x18x4xf32>
    %1 = vector.shape_cast %0 : vector<1x1x18x18x4xf32> to vector<18x18x4xf32>
    %cst = arith.constant 0.000000e+00 : f32
    %2 = vector.broadcast %cst : f32 to vector<18x18x4xf32>
    %3 = arith.maximumf %1, %2 : vector<18x18x4xf32>
    %4 = vector.extract_strided_slice %3 {offsets = [0, 0, 0], sizes = [16, 16, 4], strides = [1, 1, 1]} : vector<18x18x4xf32> to vector<16x16x4xf32>
    %5 = vector.shape_cast %4 : vector<16x16x4xf32> to vector<256x4xf32>
    %6 = vector.extract_strided_slice %3 {offsets = [1, 0, 0], sizes = [16, 16, 4], strides = [1, 1, 1]} : vector<18x18x4xf32> to vector<16x16x4xf32>
    %7 = vector.shape_cast %6 : vector<16x16x4xf32> to vector<256x4xf32>
    %8 = vector.extract_strided_slice %3 {offsets = [2, 0, 0], sizes = [16, 16, 4], strides = [1, 1, 1]} : vector<18x18x4xf32> to vector<16x16x4xf32>
    %9 = vector.shape_cast %8 : vector<16x16x4xf32> to vector<256x4xf32>
    %10 = vector.extract_strided_slice %3 {offsets = [0, 1, 0], sizes = [16, 16, 4], strides = [1, 1, 1]} : vector<18x18x4xf32> to vector<16x16x4xf32>
    %11 = vector.shape_cast %10 : vector<16x16x4xf32> to vector<256x4xf32>
    %12 = vector.extract_strided_slice %3 {offsets = [1, 1, 0], sizes = [16, 16, 4], strides = [1, 1, 1]} : vector<18x18x4xf32> to vector<16x16x4xf32>
    %13 = vector.shape_cast %12 : vector<16x16x4xf32> to vector<256x4xf32>
    %14 = vector.extract_strided_slice %3 {offsets = [2, 1, 0], sizes = [16, 16, 4], strides = [1, 1, 1]} : vector<18x18x4xf32> to vector<16x16x4xf32>
    %15 = vector.shape_cast %14 : vector<16x16x4xf32> to vector<256x4xf32>
    %16 = vector.extract_strided_slice %3 {offsets = [0, 2, 0], sizes = [16, 16, 4], strides = [1, 1, 1]} : vector<18x18x4xf32> to vector<16x16x4xf32>
    %17 = vector.shape_cast %16 : vector<16x16x4xf32> to vector<256x4xf32>
    %18 = vector.extract_strided_slice %3 {offsets = [1, 2, 0], sizes = [16, 16, 4], strides = [1, 1, 1]} : vector<18x18x4xf32> to vector<16x16x4xf32>
    %19 = vector.shape_cast %18 : vector<16x16x4xf32> to vector<256x4xf32>
    %20 = vector.extract_strided_slice %3 {offsets = [2, 2, 0], sizes = [16, 16, 4], strides = [1, 1, 1]} : vector<18x18x4xf32> to vector<16x16x4xf32>
    %21 = vector.shape_cast %20 : vector<16x16x4xf32> to vector<256x4xf32>
    %22 = tpu.concatenate %5, %7, %9, %11, %13, %15, %17, %19, %21 in 1 : vector<256x4xf32>, vector<256x4xf32>, vector<256x4xf32>, vector<256x4xf32>, vector<256x4xf32>, vector<256x4xf32>, vector<256x4xf32>, vector<256x4xf32>, vector<256x4xf32> -> vector<256x36xf32>
    %23 = arith.truncf %22 : vector<256x36xf32> to vector<256x36xbf16>
    %c0_4 = arith.constant 0 : index
    %c0_5 = arith.constant 0 : index
    %24 = vector.load %arg3[%c0_4, %c0_5] : memref<36x32xbf16, #tpu.memory_space<vmem>>, vector<36x32xbf16>
    %cst_6 = arith.constant dense<0.000000e+00> : vector<256x32xf32>
    %25 = tpu.matmul %23, %24, %cst_6 {dimension_numbers = #tpu.dot_dimension_numbers<[1], [0], [0], [1], [0, 0, 1, 1], [], []>} : vector<256x36xbf16>, vector<36x32xbf16>, vector<256x32xf32> -> vector<256x32xf32>
    %c0_7 = arith.constant 0 : index
    %c0_8 = arith.constant 0 : index
    %26 = vector.load %arg4[%c0_7, %c0_8] : memref<1x32xf32, #tpu.memory_space<vmem>>, vector<1x32xf32>
    %27 = vector.broadcast %26 : vector<1x32xf32> to vector<256x32xf32>
    %28 = arith.addf %25, %27 : vector<256x32xf32>
    %29 = vector.extract_strided_slice %28 {offsets = [0, 0], sizes = [16, 8], strides = [1, 1]} : vector<256x32xf32> to vector<16x8xf32>
    %30 = vector.extract_strided_slice %28 {offsets = [16, 0], sizes = [16, 8], strides = [1, 1]} : vector<256x32xf32> to vector<16x8xf32>
    %31 = vector.extract_strided_slice %28 {offsets = [32, 0], sizes = [16, 8], strides = [1, 1]} : vector<256x32xf32> to vector<16x8xf32>
    %32 = vector.extract_strided_slice %28 {offsets = [48, 0], sizes = [16, 8], strides = [1, 1]} : vector<256x32xf32> to vector<16x8xf32>
    %33 = vector.extract_strided_slice %28 {offsets = [64, 0], sizes = [16, 8], strides = [1, 1]} : vector<256x32xf32> to vector<16x8xf32>
    %34 = vector.extract_strided_slice %28 {offsets = [80, 0], sizes = [16, 8], strides = [1, 1]} : vector<256x32xf32> to vector<16x8xf32>
    %35 = vector.extract_strided_slice %28 {offsets = [96, 0], sizes = [16, 8], strides = [1, 1]} : vector<256x32xf32> to vector<16x8xf32>
    %36 = vector.extract_strided_slice %28 {offsets = [112, 0], sizes = [16, 8], strides = [1, 1]} : vector<256x32xf32> to vector<16x8xf32>
    %37 = vector.extract_strided_slice %28 {offsets = [128, 0], sizes = [16, 8], strides = [1, 1]} : vector<256x32xf32> to vector<16x8xf32>
    %38 = vector.extract_strided_slice %28 {offsets = [144, 0], sizes = [16, 8], strides = [1, 1]} : vector<256x32xf32> to vector<16x8xf32>
    %39 = vector.extract_strided_slice %28 {offsets = [160, 0], sizes = [16, 8], strides = [1, 1]} : vector<256x32xf32> to vector<16x8xf32>
    %40 = vector.extract_strided_slice %28 {offsets = [176, 0], sizes = [16, 8], strides = [1, 1]} : vector<256x32xf32> to vector<16x8xf32>
    %41 = vector.extract_strided_slice %28 {offsets = [192, 0], sizes = [16, 8], strides = [1, 1]} : vector<256x32xf32> to vector<16x8xf32>
    %42 = vector.extract_strided_slice %28 {offsets = [208, 0], sizes = [16, 8], strides = [1, 1]} : vector<256x32xf32> to vector<16x8xf32>
    %43 = vector.extract_strided_slice %28 {offsets = [224, 0], sizes = [16, 8], strides = [1, 1]} : vector<256x32xf32> to vector<16x8xf32>
    %44 = vector.extract_strided_slice %28 {offsets = [240, 0], sizes = [16, 8], strides = [1, 1]} : vector<256x32xf32> to vector<16x8xf32>
    %45 = tpu.concatenate %29, %30, %31, %32, %33, %34, %35, %36, %37, %38, %39, %40, %41, %42, %43, %44 in 1 : vector<16x8xf32>, vector<16x8xf32>, vector<16x8xf32>, vector<16x8xf32>, vector<16x8xf32>, vector<16x8xf32>, vector<16x8xf32>, vector<16x8xf32>, vector<16x8xf32>, vector<16x8xf32>, vector<16x8xf32>, vector<16x8xf32>, vector<16x8xf32>, vector<16x8xf32>, vector<16x8xf32>, vector<16x8xf32> -> vector<16x128xf32>
    %c0_9 = arith.constant 0 : index
    %c0_10 = arith.constant 0 : index
    %c0_11 = arith.constant 0 : index
    %c0_12 = arith.constant 0 : index
    %c0_13 = arith.constant 0 : index
    %46 = vector.load %arg5[%c0_9, %c0_10, %c0_11, %c0_12, %c0_13] : memref<1x2x2x16x128xf32, #tpu.memory_space<vmem>>, vector<1x1x1x16x128xf32>
    %47 = vector.shape_cast %46 : vector<1x1x1x16x128xf32> to vector<16x128xf32>
    %48 = vector.shape_cast %45 : vector<16x128xf32> to vector<1x1x1x16x128xf32>
    tpu.vector_store %arg5[%c0_9, %c0_10, %c0_11, %c0_12, %c0_13], %48 {strides = array<i32>} : memref<1x2x2x16x128xf32, #tpu.memory_space<vmem>>, vector<1x1x1x16x128xf32>,
    %49 = vector.extract_strided_slice %28 {offsets = [0, 8], sizes = [16, 8], strides = [1, 1]} : vector<256x32xf32> to vector<16x8xf32>
    %50 = vector.extract_strided_slice %28 {offsets = [16, 8], sizes = [16, 8], strides = [1, 1]} : vector<256x32xf32> to vector<16x8xf32>
    %51 = vector.extract_strided_slice %28 {offsets = [32, 8], sizes = [16, 8], strides = [1, 1]} : vector<256x32xf32> to vector<16x8xf32>
    %52 = vector.extract_strided_slice %28 {offsets = [48, 8], sizes = [16, 8], strides = [1, 1]} : vector<256x32xf32> to vector<16x8xf32>
    %53 = vector.extract_strided_slice %28 {offsets = [64, 8], sizes = [16, 8], strides = [1, 1]} : vector<256x32xf32> to vector<16x8xf32>
    %54 = vector.extract_strided_slice %28 {offsets = [80, 8], sizes = [16, 8], strides = [1, 1]} : vector<256x32xf32> to vector<16x8xf32>
    %55 = vector.extract_strided_slice %28 {offsets = [96, 8], sizes = [16, 8], strides = [1, 1]} : vector<256x32xf32> to vector<16x8xf32>
    %56 = vector.extract_strided_slice %28 {offsets = [112, 8], sizes = [16, 8], strides = [1, 1]} : vector<256x32xf32> to vector<16x8xf32>
    %57 = vector.extract_strided_slice %28 {offsets = [128, 8], sizes = [16, 8], strides = [1, 1]} : vector<256x32xf32> to vector<16x8xf32>
    %58 = vector.extract_strided_slice %28 {offsets = [144, 8], sizes = [16, 8], strides = [1, 1]} : vector<256x32xf32> to vector<16x8xf32>
    %59 = vector.extract_strided_slice %28 {offsets = [160, 8], sizes = [16, 8], strides = [1, 1]} : vector<256x32xf32> to vector<16x8xf32>
    %60 = vector.extract_strided_slice %28 {offsets = [176, 8], sizes = [16, 8], strides = [1, 1]} : vector<256x32xf32> to vector<16x8xf32>
    %61 = vector.extract_strided_slice %28 {offsets = [192, 8], sizes = [16, 8], strides = [1, 1]} : vector<256x32xf32> to vector<16x8xf32>
    %62 = vector.extract_strided_slice %28 {offsets = [208, 8], sizes = [16, 8], strides = [1, 1]} : vector<256x32xf32> to vector<16x8xf32>
    %63 = vector.extract_strided_slice %28 {offsets = [224, 8], sizes = [16, 8], strides = [1, 1]} : vector<256x32xf32> to vector<16x8xf32>
    %64 = vector.extract_strided_slice %28 {offsets = [240, 8], sizes = [16, 8], strides = [1, 1]} : vector<256x32xf32> to vector<16x8xf32>
    %65 = tpu.concatenate %49, %50, %51, %52, %53, %54, %55, %56, %57, %58, %59, %60, %61, %62, %63, %64 in 1 : vector<16x8xf32>, vector<16x8xf32>, vector<16x8xf32>, vector<16x8xf32>, vector<16x8xf32>, vector<16x8xf32>, vector<16x8xf32>, vector<16x8xf32>, vector<16x8xf32>, vector<16x8xf32>, vector<16x8xf32>, vector<16x8xf32>, vector<16x8xf32>, vector<16x8xf32>, vector<16x8xf32>, vector<16x8xf32> -> vector<16x128xf32>
    %c0_14 = arith.constant 0 : index
    %c0_15 = arith.constant 0 : index
    %c1 = arith.constant 1 : index
    %c0_16 = arith.constant 0 : index
    %c0_17 = arith.constant 0 : index
    %66 = vector.load %arg5[%c0_14, %c0_15, %c1, %c0_16, %c0_17] : memref<1x2x2x16x128xf32, #tpu.memory_space<vmem>>, vector<1x1x1x16x128xf32>
    %67 = vector.shape_cast %66 : vector<1x1x1x16x128xf32> to vector<16x128xf32>
    %68 = vector.shape_cast %65 : vector<16x128xf32> to vector<1x1x1x16x128xf32>
    tpu.vector_store %arg5[%c0_14, %c0_15, %c1, %c0_16, %c0_17], %68 {strides = array<i32>} : memref<1x2x2x16x128xf32, #tpu.memory_space<vmem>>, vector<1x1x1x16x128xf32>,
    %69 = vector.extract_strided_slice %28 {offsets = [0, 16], sizes = [16, 8], strides = [1, 1]} : vector<256x32xf32> to vector<16x8xf32>
    %70 = vector.extract_strided_slice %28 {offsets = [16, 16], sizes = [16, 8], strides = [1, 1]} : vector<256x32xf32> to vector<16x8xf32>
    %71 = vector.extract_strided_slice %28 {offsets = [32, 16], sizes = [16, 8], strides = [1, 1]} : vector<256x32xf32> to vector<16x8xf32>
    %72 = vector.extract_strided_slice %28 {offsets = [48, 16], sizes = [16, 8], strides = [1, 1]} : vector<256x32xf32> to vector<16x8xf32>
    %73 = vector.extract_strided_slice %28 {offsets = [64, 16], sizes = [16, 8], strides = [1, 1]} : vector<256x32xf32> to vector<16x8xf32>
    %74 = vector.extract_strided_slice %28 {offsets = [80, 16], sizes = [16, 8], strides = [1, 1]} : vector<256x32xf32> to vector<16x8xf32>
    %75 = vector.extract_strided_slice %28 {offsets = [96, 16], sizes = [16, 8], strides = [1, 1]} : vector<256x32xf32> to vector<16x8xf32>
    %76 = vector.extract_strided_slice %28 {offsets = [112, 16], sizes = [16, 8], strides = [1, 1]} : vector<256x32xf32> to vector<16x8xf32>
    %77 = vector.extract_strided_slice %28 {offsets = [128, 16], sizes = [16, 8], strides = [1, 1]} : vector<256x32xf32> to vector<16x8xf32>
    %78 = vector.extract_strided_slice %28 {offsets = [144, 16], sizes = [16, 8], strides = [1, 1]} : vector<256x32xf32> to vector<16x8xf32>
    %79 = vector.extract_strided_slice %28 {offsets = [160, 16], sizes = [16, 8], strides = [1, 1]} : vector<256x32xf32> to vector<16x8xf32>
    %80 = vector.extract_strided_slice %28 {offsets = [176, 16], sizes = [16, 8], strides = [1, 1]} : vector<256x32xf32> to vector<16x8xf32>
    %81 = vector.extract_strided_slice %28 {offsets = [192, 16], sizes = [16, 8], strides = [1, 1]} : vector<256x32xf32> to vector<16x8xf32>
    %82 = vector.extract_strided_slice %28 {offsets = [208, 16], sizes = [16, 8], strides = [1, 1]} : vector<256x32xf32> to vector<16x8xf32>
    %83 = vector.extract_strided_slice %28 {offsets = [224, 16], sizes = [16, 8], strides = [1, 1]} : vector<256x32xf32> to vector<16x8xf32>
    %84 = vector.extract_strided_slice %28 {offsets = [240, 16], sizes = [16, 8], strides = [1, 1]} : vector<256x32xf32> to vector<16x8xf32>
    %85 = tpu.concatenate %69, %70, %71, %72, %73, %74, %75, %76, %77, %78, %79, %80, %81, %82, %83, %84 in 1 : vector<16x8xf32>, vector<16x8xf32>, vector<16x8xf32>, vector<16x8xf32>, vector<16x8xf32>, vector<16x8xf32>, vector<16x8xf32>, vector<16x8xf32>, vector<16x8xf32>, vector<16x8xf32>, vector<16x8xf32>, vector<16x8xf32>, vector<16x8xf32>, vector<16x8xf32>, vector<16x8xf32>, vector<16x8xf32> -> vector<16x128xf32>
    %c0_18 = arith.constant 0 : index
    %c1_19 = arith.constant 1 : index
    %c0_20 = arith.constant 0 : index
    %c0_21 = arith.constant 0 : index
    %c0_22 = arith.constant 0 : index
    %86 = vector.load %arg5[%c0_18, %c1_19, %c0_20, %c0_21, %c0_22] : memref<1x2x2x16x128xf32, #tpu.memory_space<vmem>>, vector<1x1x1x16x128xf32>
    %87 = vector.shape_cast %86 : vector<1x1x1x16x128xf32> to vector<16x128xf32>
    %88 = vector.shape_cast %85 : vector<16x128xf32> to vector<1x1x1x16x128xf32>
    tpu.vector_store %arg5[%c0_18, %c1_19, %c0_20, %c0_21, %c0_22], %88 {strides = array<i32>} : memref<1x2x2x16x128xf32, #tpu.memory_space<vmem>>, vector<1x1x1x16x128xf32>,
    %89 = vector.extract_strided_slice %28 {offsets = [0, 24], sizes = [16, 8], strides = [1, 1]} : vector<256x32xf32> to vector<16x8xf32>
    %90 = vector.extract_strided_slice %28 {offsets = [16, 24], sizes = [16, 8], strides = [1, 1]} : vector<256x32xf32> to vector<16x8xf32>
    %91 = vector.extract_strided_slice %28 {offsets = [32, 24], sizes = [16, 8], strides = [1, 1]} : vector<256x32xf32> to vector<16x8xf32>
    %92 = vector.extract_strided_slice %28 {offsets = [48, 24], sizes = [16, 8], strides = [1, 1]} : vector<256x32xf32> to vector<16x8xf32>
    %93 = vector.extract_strided_slice %28 {offsets = [64, 24], sizes = [16, 8], strides = [1, 1]} : vector<256x32xf32> to vector<16x8xf32>
    %94 = vector.extract_strided_slice %28 {offsets = [80, 24], sizes = [16, 8], strides = [1, 1]} : vector<256x32xf32> to vector<16x8xf32>
    %95 = vector.extract_strided_slice %28 {offsets = [96, 24], sizes = [16, 8], strides = [1, 1]} : vector<256x32xf32> to vector<16x8xf32>
    %96 = vector.extract_strided_slice %28 {offsets = [112, 24], sizes = [16, 8], strides = [1, 1]} : vector<256x32xf32> to vector<16x8xf32>
    %97 = vector.extract_strided_slice %28 {offsets = [128, 24], sizes = [16, 8], strides = [1, 1]} : vector<256x32xf32> to vector<16x8xf32>
    %98 = vector.extract_strided_slice %28 {offsets = [144, 24], sizes = [16, 8], strides = [1, 1]} : vector<256x32xf32> to vector<16x8xf32>
    %99 = vector.extract_strided_slice %28 {offsets = [160, 24], sizes = [16, 8], strides = [1, 1]} : vector<256x32xf32> to vector<16x8xf32>
    %100 = vector.extract_strided_slice %28 {offsets = [176, 24], sizes = [16, 8], strides = [1, 1]} : vector<256x32xf32> to vector<16x8xf32>
    %101 = vector.extract_strided_slice %28 {offsets = [192, 24], sizes = [16, 8], strides = [1, 1]} : vector<256x32xf32> to vector<16x8xf32>
    %102 = vector.extract_strided_slice %28 {offsets = [208, 24], sizes = [16, 8], strides = [1, 1]} : vector<256x32xf32> to vector<16x8xf32>
    %103 = vector.extract_strided_slice %28 {offsets = [224, 24], sizes = [16, 8], strides = [1, 1]} : vector<256x32xf32> to vector<16x8xf32>
    %104 = vector.extract_strided_slice %28 {offsets = [240, 24], sizes = [16, 8], strides = [1, 1]} : vector<256x32xf32> to vector<16x8xf32>
    %105 = tpu.concatenate %89, %90, %91, %92, %93, %94, %95, %96, %97, %98, %99, %100, %101, %102, %103, %104 in 1 : vector<16x8xf32>, vector<16x8xf32>, vector<16x8xf32>, vector<16x8xf32>, vector<16x8xf32>, vector<16x8xf32>, vector<16x8xf32>, vector<16x8xf32>, vector<16x8xf32>, vector<16x8xf32>, vector<16x8xf32>, vector<16x8xf32>, vector<16x8xf32>, vector<16x8xf32>, vector<16x8xf32>, vector<16x8xf32> -> vector<16x128xf32>
    %c0_23 = arith.constant 0 : index
    %c1_24 = arith.constant 1 : index
    %c1_25 = arith.constant 1 : index
    %c0_26 = arith.constant 0 : index
    %c0_27 = arith.constant 0 : index
    %106 = vector.load %arg5[%c0_23, %c1_24, %c1_25, %c0_26, %c0_27] : memref<1x2x2x16x128xf32, #tpu.memory_space<vmem>>, vector<1x1x1x16x128xf32>
    %107 = vector.shape_cast %106 : vector<1x1x1x16x128xf32> to vector<16x128xf32>
    %108 = vector.shape_cast %105 : vector<16x128xf32> to vector<1x1x1x16x128xf32>
    tpu.vector_store %arg5[%c0_23, %c1_24, %c1_25, %c0_26, %c0_27], %108 {strides = array<i32>} : memref<1x2x2x16x128xf32, #tpu.memory_space<vmem>>, vector<1x1x1x16x128xf32>,
    return
  }
  func.func @transform_0(%arg0: i32, %arg1: i32) -> (i32, i32, i32, i32, i32) {
    %c0_i32 = arith.constant 0 : i32
    %c0_i32_0 = arith.constant 0 : i32
    %c0_i32_1 = arith.constant 0 : i32
    %c0_i32_2 = arith.constant 0 : i32
    return %arg0, %arg1, %c0_i32, %c0_i32_0, %c0_i32_1 : i32, i32, i32, i32, i32
  }
  func.func @transform_1(%arg0: i32, %arg1: i32) -> (i32, i32) {
    %c0_i32 = arith.constant 0 : i32
    %c0_i32_0 = arith.constant 0 : i32
    %c0_i32_1 = arith.constant 0 : i32
    return %c0_i32, %c0_i32_0 : i32, i32
  }
  func.func @transform_2(%arg0: i32, %arg1: i32) -> (i32, i32) {
    %c0_i32 = arith.constant 0 : i32
    %c0_i32_0 = arith.constant 0 : i32
    %c0_i32_1 = arith.constant 0 : i32
    return %c0_i32, %c0_i32_0 : i32, i32
  }
  func.func @transform_3(%arg0: i32, %arg1: i32) -> (i32, i32, i32, i32, i32) {
    %c0_i32 = arith.constant 0 : i32
    %c0_i32_0 = arith.constant 0 : i32
    %c0_i32_1 = arith.constant 0 : i32
    %c0_i32_2 = arith.constant 0 : i32
    return %arg0, %c0_i32, %c0_i32_0, %arg1, %c0_i32_1 : i32, i32, i32, i32, i32
  }
}

</mosaic_0001>

<llo_original>
// kernel: tile.9
$region0: #{tile.9}
  %s0 = inlined_call_operand.vmem [shape: f32[4,8], index: 0, kind: input, shape index: {}]
  %s1 = inlined_call_operand.vmem [shape: f32[1,32], index: 1, kind: output, shape index: {}]
  $region1: #{tile.9} parent=0
    #allocation0 [shape = 'u8[4096]{0}', space=vmem, size = 0x1000, scoped, tag = 'scoped mem for output reshape']
    #allocation1 [shape = 'u8[4096]{0}', space=vmem, size = 0x1000, scoped, tag = 'scoped mem for input reshape']
    %s3 = ssub.s32 16, 1
    %v4 = vld [vmem:[%s0] sm:%s3]
    %5 = vst [vmem:[#allocation1] sm:%s3] %v4
    %v6 = vld [vmem:[#allocation1] sm:$0x1]
    %vm7 = vcmask 64512
    %8 = vst.msk [vmem:[#allocation0] sm:$0x1] %vm7, %v6
    %s9 = scalar_lea.vmem [#allocation1], 3
    %v10 = vld [vmem:[%s9] sm:$0x1]
    %11 = vrot.lane.b32.xlu0 %v10, 24
    %v12 = vpop.permute.xlu0 %11
    %vm13 = vcmask 261312
    %14 = vst.msk [vmem:[#allocation0] sm:$0x1] %vm13, %v12
    %s15 = scalar_lea.vmem [#allocation1], 2
    %v16 = vld [vmem:[%s15] sm:$0x1]
    %17 = vrot.lane.b32.xlu0 %v16, 16
    %v18 = vpop.permute.xlu0 %17
    %vm19 = vcmask 195712
    %20 = vst.msk [vmem:[#allocation0] sm:$0x1] %vm19, %v18
    %s21 = scalar_lea.vmem [#allocation1], 1
    %v22 = vld [vmem:[%s21] sm:$0x1]
    %23 = vrot.lane.b32.xlu0 %v22, 8
    %v24 = vpop.permute.xlu0 %23
    %vm25 = vcmask 130112
    %26 = vst.msk [vmem:[#allocation0] sm:$0x1] %vm25, %v24
    %s28 = ssub.s32 2, 1
    %v29 = vld [vmem:[#allocation0] sm:%s28]
    %s31 = ssub.s32 2, 1
    %32 = vst [vmem:[%s1] sm:%s31] %v29

// kernel: tile.8
$region0: #{tile.8}
  #allocation0 [shape = 's32[1]{0}', space=sflag, size = 0x4, scoped, tag = 'scoped memory for tile.8']
  %s0 = inlined_call_operand.vmem [shape: f32[8], index: 0, kind: input, shape index: {}]
  %s1 = inlined_call_operand.vmem [shape: f32[4,8], index: 1, kind: output, shape index: {}]
  // Predicated region
  $region2: #{tile.8} parent=0 // pred_check
    _
  $region3: #{tile.8} parent=0 // pred_check_branch
    %3 = sbr.rel (0) target = $region5
  $region4: #{tile.8} parent=0 // pred_region
    _
  $region5: #{tile.8} parent=0 // pred_fallthru
    _
  %v4 = vld [vmem:[%s0] ss:$0 sm:$0xff]
  %5 = vst [vmem:[%s1] sm:$0xf] %v4

// kernel: block_up_forward.1
$region0: #{block_up_forward.1}
  #allocation0 [shape = 'u32[]', space=smem, size = 0x4, offset = 0x4, fixed_abs, tag = 'smem constant byte address 0x4 - core index']
  #allocation1 [shape = 'u32[72,128]{1,0:T(1,128)}', space=vmem, size = 0x9000, scoped, tag = 'internal scratch']
  %s0 = inlined_call_operand.vmem [shape: f32[2,1,18,18,4], index: 0, kind: input, shape index: {}]
  %s1 = inlined_call_operand.vmem [shape: bf16[36,32], index: 1, kind: input, shape index: {}]
  %s2 = inlined_call_operand.vmem [shape: f32[1,32], index: 2, kind: input, shape index: {}]
  %s3 = inlined_call_operand.vmem [shape: f32[2,2,2,16,128], index: 3, kind: output, shape index: {}]
  %s4 = sld [smem:[#allocation0]]
  $region45: #{block_up_forward.1} parent=0
    _
  %s6 = ssub.s32 1, %s4
  %s7 = scalar_select 0, %s6, %s4
  loop: start=0, step=1, limit=4
  $region2: #{block_up_forward.1} parent=0 // loop_pre_header
    _
  $region3: #{block_up_forward.1} parent=0 // loop_header
    %s9 = sphi 0, %s13
    %p10 = scmp.ge.s32.totalorder %s9, 4
    %s16 = sphi 0, %s28
    %s17 = sphi 0, %s24
    %s18 = sphi 0, %s16
    %s19 = sphi 0, %s17
    %s20 = sphi 0, %s18
    %s21 = sphi 0, %s19
    %s33 = sphi 0, %s35
    %s36 = sphi 0, %s33
    %s37 = sphi 0, %s36
    %s53 = sphi 0, %s37
    %s57 = sphi 0, %s57
    %s59 = sphi 0, %s57
    %s60 = sphi 0, %s59
    %s74 = sphi 0, %s60
    %s78 = sphi 0, %s78
    %s80 = sphi 0, %s78
    %s81 = sphi 0, %s80
    %s95 = sphi 0, %s81
    %s103 = sphi 0, %s105
    %s106 = sphi 0, %s103
    %s107 = sphi 0, %s106
    %s123 = sphi 0, %s107
  $region4: #{block_up_forward.1} parent=0 // loop_header_branch
    %12 = sbr.rel (%p10) target = $region8
  $region5: #{block_up_forward.1} parent=0 // loop_body
    %s14 = ssub.s32 %s9, 1
    %s15 = ssub.s32 %s9, 2
    %s22 = sadd.s32 1, %s17
    %p23 = scmp.ge.s32.totalorder %s22, 1
    %s24 = scalar_select %p23, 0, %s22
    %s25 = sadd.s32 1, %s16
    %s26 = scalar_select %p23, %s25, %s16
    %p27 = scmp.ge.s32.totalorder %s26, 2
    %s28 = scalar_select %p27, 0, %s26
    %s29 = ssub.s32 %s16, %s28
    %s30 = ssub.s32 %s17, %s24
    %s31 = sor.u32 %s29, %s30
    %p32 = scmp.eq.s32.totalorder %s31, 0
    %s34 = sadd.s32 %s33, 1
    %s35 = scalar_select %p32, %s33, %s34
    %p38 = pneg %p32
    %p39 = scmp.eq.s32.totalorder %s9, 1
    %p40 = por %p38, %p39
    %p41 = scmp.ne.s32.totalorder %s33, %s36
    %p42 = scmp.eq.s32.totalorder %s9, 0
    %p43 = por %p41, %p42
    %p44 = scmp.ne.s32.totalorder %s33, %s36
    %p45 = scmp.eq.s32.totalorder %s14, 1
    %p46 = por %p44, %p45
    %p47 = scmp.ne.s32.totalorder %s36, %s37
    %p48 = scmp.eq.s32.totalorder %s14, 0
    %p49 = por %p47, %p48
    %p50 = scmp.ne.s32.totalorder %s36, %s37
    %p51 = scmp.eq.s32.totalorder %s15, 1
    %p52 = por %p50, %p51
    %p54 = scmp.ne.s32.totalorder %s37, %s53
    %p55 = scmp.eq.s32.totalorder %s15, 0
    %p56 = por %p54, %p55
    %s58 = sadd.s32 %s57, 1
    %p61 = scmp.eq.s32.totalorder %s9, 1
    %p62 = scmp.ne.s32.totalorder %s57, %s59
    %p63 = scmp.eq.s32.totalorder %s9, 0
    %p64 = por %p62, %p63
    %p65 = scmp.ne.s32.totalorder %s57, %s59
    %p66 = scmp.eq.s32.totalorder %s14, 1
    %p67 = por %p65, %p66
    %p68 = scmp.ne.s32.totalorder %s59, %s60
    %p69 = scmp.eq.s32.totalorder %s14, 0
    %p70 = por %p68, %p69
    %p71 = scmp.ne.s32.totalorder %s59, %s60
    %p72 = scmp.eq.s32.totalorder %s15, 1
    %p73 = por %p71, %p72
    %p75 = scmp.ne.s32.totalorder %s60, %s74
    %p76 = scmp.eq.s32.totalorder %s15, 0
    %p77 = por %p75, %p76
    %s79 = sadd.s32 %s78, 1
    %p82 = scmp.eq.s32.totalorder %s9, 1
    %p83 = scmp.ne.s32.totalorder %s78, %s80
    %p84 = scmp.eq.s32.totalorder %s9, 0
    %p85 = por %p83, %p84
    %p86 = scmp.ne.s32.totalorder %s78, %s80
    %p87 = scmp.eq.s32.totalorder %s14, 1
    %p88 = por %p86, %p87
    %p89 = scmp.ne.s32.totalorder %s80, %s81
    %p90 = scmp.eq.s32.totalorder %s14, 0
    %p91 = por %p89, %p90
    %p92 = scmp.ne.s32.totalorder %s80, %s81
    %p93 = scmp.eq.s32.totalorder %s15, 1
    %p94 = por %p92, %p93
    %p96 = scmp.ne.s32.totalorder %s81, %s95
    %p97 = scmp.eq.s32.totalorder %s15, 0
    %p98 = por %p96, %p97
    %s99 = ssub.s32 %s16, %s28
    %s100 = ssub.s32 %s17, %s24
    %s101 = sor.u32 %s99, %s100
    %p102 = scmp.eq.s32.totalorder %s101, 0
    %s104 = sadd.s32 %s103, 1
    %s105 = scalar_select %p102, %s103, %s104
    %p108 = pneg %p102
    %p109 = scmp.eq.s32.totalorder %s9, 1
    %p110 = por %p108, %p109
    %p111 = scmp.ne.s32.totalorder %s103, %s106
    %p112 = scmp.eq.s32.totalorder %s9, 0
    %p113 = por %p111, %p112
    %p114 = scmp.ne.s32.totalorder %s103, %s106
    %p115 = scmp.eq.s32.totalorder %s14, 1
    %p116 = por %p114, %p115
    %p117 = scmp.ne.s32.totalorder %s106, %s107
    %p118 = scmp.eq.s32.totalorder %s14, 0
    %p119 = por %p117, %p118
    %p120 = scmp.ne.s32.totalorder %s106, %s107
    %p121 = scmp.eq.s32.totalorder %s15, 1
    %p122 = por %p120, %p121
    %p124 = scmp.ne.s32.totalorder %s107, %s123
    %p125 = scmp.eq.s32.totalorder %s15, 0
    %p126 = por %p124, %p125
    %p127 = scmp.le.s32.totalorder 1, %s9
    %p128 = scmp.lt.s32.totalorder %s9, 3
    %p129 = pnand %p127, %p128
    %p130 = pneg %p129
    // Predicated region
    $region9: #{block_up_forward.1} parent=5 // pred_check
      _
    $region10: #{block_up_forward.1} parent=5 // pred_check_branch
      %132 = sbr.rel (%p129) target = $region12
    $region11: #{block_up_forward.1} parent=5 // pred_region
      %s133 = ssub.s32 %s9, 1
      // Predicated region
      $region13: #{block_up_forward.1} parent=11 // pred_check
        %p134 = pneg %p70
      $region14: #{block_up_forward.1} parent=11 // pred_check_branch
        %136 = sbr.rel (%p134) target = $region16
      $region15: #{block_up_forward.1} parent=11 // pred_region
        _
      $region16: #{block_up_forward.1} parent=11 // pred_fallthru
        _
      // Predicated region
      $region17: #{block_up_forward.1} parent=11 // pred_check
        %p137 = pneg %p91
      $region18: #{block_up_forward.1} parent=11 // pred_check_branch
        %139 = sbr.rel (%p137) target = $region20
      $region19: #{block_up_forward.1} parent=11 // pred_region
        _
      $region20: #{block_up_forward.1} parent=11 // pred_fallthru
        _
    $region12: #{block_up_forward.1} parent=5 // pred_fallthru
      _
    %p140 = scmp.lt.s32.totalorder %s9, 2
    // Predicated region
    $region21: #{block_up_forward.1} parent=5 // pred_check
      %p141 = pneg %p140
    $region22: #{block_up_forward.1} parent=5 // pred_check_branch
      %143 = sbr.rel (%p141) target = $region24
    $region23: #{block_up_forward.1} parent=5 // pred_region
      // Predicated region
      $region25: #{block_up_forward.1} parent=23 // pred_check
        %p144 = pneg %p43
      $region26: #{block_up_forward.1} parent=23 // pred_check_branch
        %146 = sbr.rel (%p144) target = $region28
      $region27: #{block_up_forward.1} parent=23 // pred_region
        %p147 = scmp.lt.s32.totalorder %s16, 1
        %s148 = scalar_select %p147, %s16, 1
        %p149 = scmp.lt.s32.totalorder %s17, 0
        %s150 = scalar_select %p149, %s17, 0
        %s151 = smul.addr %s150, 54
        %s152 = smul.addr %s148, 54
        %s153 = sadd.s32 %s151, %s152
        %s154 = smul.addr %s153, 8
        %s155 = scalar_lea.vmem %s0, %s154
      $region28: #{block_up_forward.1} parent=23 // pred_fallthru
        _
    $region24: #{block_up_forward.1} parent=5 // pred_fallthru
      _
    %p156 = scmp.le.s32.totalorder 1, %s9
    %p157 = scmp.lt.s32.totalorder %s9, 3
    %p158 = pnand %p156, %p157
    %p159 = pneg %p158
    // Predicated region
    $region29: #{block_up_forward.1} parent=5 // pred_check
      _
    $region30: #{block_up_forward.1} parent=5 // pred_check_branch
      %161 = sbr.rel (%p158) target = $region32
    $region31: #{block_up_forward.1} parent=5 // pred_region
      %s162 = ssub.s32 %s9, 1
      %p163 = scmp.lt.s32.totalorder %s18, 1
      %s164 = scalar_select %p163, %s18, 1
      %p165 = scmp.lt.s32.totalorder %s19, 0
      %s166 = scalar_select %p165, %s19, 0
      %s167 = smul.addr %s166, 54
      %s168 = smul.addr %s164, 54
      %s169 = sadd.s32 %s167, %s168
      %s170 = smul.addr %s169, 8
      %s171 = scalar_lea.vmem %s0, %s170
      %p172 = pneg %p49
      %p173 = pneg %p46
      %p174 = pneg %p70
      %p175 = pneg %p67
      %p176 = pneg %p91
      %p177 = pneg %p88
      %p178 = pneg %p119
      %p179 = pneg %p116
      %s180 = smul.u32 2, %s19
      %p181 = scmp.lt.s32.totalorder %s18, 1
      %s182 = scalar_select %p181, %s18, 1
      %p183 = scmp.lt.s32.totalorder %s180, 1
      %s184 = scalar_select %p183, %s180, 1
      %s185 = smul.addr %s182, 8
      %s186 = sadd.s32 %s184, %s185
      %s187 = smul.addr %s186, 8
      %s188 = scalar_lea.vmem %s3, %s187
      %p189 = scmp.lt.s32.totalorder %s18, 1
      %s190 = scalar_select %p189, %s18, 1
      %p191 = scmp.lt.s32.totalorder %s19, 0
      %s192 = scalar_select %p191, %s19, 0
      %s193 = smul.addr %s192, 54
      %s194 = smul.addr %s190, 54
      %s195 = sadd.s32 %s193, %s194
      %s196 = smul.addr %s195, 8
      %s197 = scalar_lea.vmem %s0, %s196
      %s198 = smul.u32 2, %s19
      %p199 = scmp.lt.s32.totalorder %s18, 1
      %s200 = scalar_select %p199, %s18, 1
      %p201 = scmp.lt.s32.totalorder %s198, 1
      %s202 = scalar_select %p201, %s198, 1
      %s203 = smul.addr %s200, 8
      %s204 = sadd.s32 %s202, %s203
      %s205 = smul.addr %s204, 8
      %s206 = scalar_lea.vmem %s3, %s205
      %s207 = smul.u32 2, %s19
      %v209 = vld [vmem:[%s197] sm:$0xff]
      %v210 = vld [vmem:[%s197 + $0x8] sm:$0xff]
      %v211 = vld [vmem:[%s197 + $0x10] sm:$0x3]
      %v212 = vld [vmem:[%s197 + $0x18] sm:$0xff]
      %v213 = vld [vmem:[%s197 + $0x20] sm:$0xff]
      %v214 = vld [vmem:[%s197 + $0x28] sm:$0x3]
      %v215 = vld [vmem:[%s197 + $0x30] sm:$0xff]
      %v216 = vld [vmem:[%s197 + $0x38] sm:$0xff]
      %v217 = vld [vmem:[%s197 + $0x40] sm:$0x3]
      %v218 = vld [vmem:[%s197 + $0x48] sm:$0xff]
      %v219 = vld [vmem:[%s197 + $0x50] sm:$0xff]
      %v220 = vld [vmem:[%s197 + $0x58] sm:$0x3]
      %v221 = vld [vmem:[%s197 + $0x60] sm:$0xff]
      %v222 = vld [vmem:[%s197 + $0x68] sm:$0xff]
      %v223 = vld [vmem:[%s197 + $0x70] sm:$0x3]
      %v224 = vld [vmem:[%s197 + $0x78] sm:$0xff]
      %v225 = vld [vmem:[%s197 + $0x80] sm:$0xff]
      %v226 = vld [vmem:[%s197 + $0x88] sm:$0x3]
      %v227 = vld [vmem:[%s197 + $0x90] sm:$0xff]
      %v228 = vld [vmem:[%s197 + $0x98] sm:$0xff]
      %v229 = vld [vmem:[%s197 + $0xa0] sm:$0x3]
      %v230 = vld [vmem:[%s197 + $0xa8] sm:$0xff]
      %v231 = vld [vmem:[%s197 + $0xb0] sm:$0xff]
      %v232 = vld [vmem:[%s197 + $0xb8] sm:$0x3]
      %v233 = vld [vmem:[%s197 + $0xc0] sm:$0xff]
      %v234 = vld [vmem:[%s197 + $0xc8] sm:$0xff]
      %v235 = vld [vmem:[%s197 + $0xd0] sm:$0x3]
      %v236 = vld [vmem:[%s197 + $0xd8] sm:$0xff]
      %v237 = vld [vmem:[%s197 + $0xe0] sm:$0xff]
      %v238 = vld [vmem:[%s197 + $0xe8] sm:$0x3]
      %v239 = vld [vmem:[%s197 + $0xf0] sm:$0xff]
      %v240 = vld [vmem:[%s197 + $0xf8] sm:$0xff]
      %v241 = vld [vmem:[%s197 + $0x100] sm:$0x3]
      %v242 = vld [vmem:[%s197 + $0x108] sm:$0xff]
      %v243 = vld [vmem:[%s197 + $0x110] sm:$0xff]
      %v244 = vld [vmem:[%s197 + $0x118] sm:$0x3]
      %v245 = vld [vmem:[%s197 + $0x120] sm:$0xff]
      %v246 = vld [vmem:[%s197 + $0x128] sm:$0xff]
      %v247 = vld [vmem:[%s197 + $0x130] sm:$0x3]
      %v248 = vld [vmem:[%s197 + $0x138] sm:$0xff]
      %v249 = vld [vmem:[%s197 + $0x140] sm:$0xff]
      %v250 = vld [vmem:[%s197 + $0x148] sm:$0x3]
      %v251 = vld [vmem:[%s197 + $0x150] sm:$0xff]
      %v252 = vld [vmem:[%s197 + $0x158] sm:$0xff]
      %v253 = vld [vmem:[%s197 + $0x160] sm:$0x3]
      %v254 = vld [vmem:[%s197 + $0x168] sm:$0xff]
      %v255 = vld [vmem:[%s197 + $0x170] sm:$0xff]
      %v256 = vld [vmem:[%s197 + $0x178] sm:$0x3]
      %v257 = vld [vmem:[%s197 + $0x180] sm:$0xff]
      %v258 = vld [vmem:[%s197 + $0x188] sm:$0xff]
      %v259 = vld [vmem:[%s197 + $0x190] sm:$0x3]
      %v260 = vld [vmem:[%s197 + $0x198] sm:$0xff]
      %v261 = vld [vmem:[%s197 + $0x1a0] sm:$0xff]
      %v262 = vld [vmem:[%s197 + $0x1a8] sm:$0x3]
      %v263 = vmax.f32 %v209, 0.0
      %v264 = vmax.f32 %v210, 0.0
      %v265 = vmax.f32 %v211, 0.0
      %v266 = vmax.f32 %v212, 0.0
      %v267 = vmax.f32 %v213, 0.0
      %v268 = vmax.f32 %v214, 0.0
      %v269 = vmax.f32 %v215, 0.0
      %v270 = vmax.f32 %v216, 0.0
      %v271 = vmax.f32 %v217, 0.0
      %v272 = vmax.f32 %v218, 0.0
      %v273 = vmax.f32 %v219, 0.0
      %v274 = vmax.f32 %v220, 0.0
      %v275 = vmax.f32 %v221, 0.0
      %v276 = vmax.f32 %v222, 0.0
      %v277 = vmax.f32 %v223, 0.0
      %v278 = vmax.f32 %v224, 0.0
      %v279 = vmax.f32 %v225, 0.0
      %v280 = vmax.f32 %v226, 0.0
      %v281 = vmax.f32 %v227, 0.0
      %v282 = vmax.f32 %v228, 0.0
      %v283 = vmax.f32 %v229, 0.0
      %v284 = vmax.f32 %v230, 0.0
      %v285 = vmax.f32 %v231, 0.0
      %v286 = vmax.f32 %v232, 0.0
      %v287 = vmax.f32 %v233, 0.0
      %v288 = vmax.f32 %v234, 0.0
      %v289 = vmax.f32 %v235, 0.0
      %v290 = vmax.f32 %v236, 0.0
      %v291 = vmax.f32 %v237, 0.0
      %v292 = vmax.f32 %v238, 0.0
      %v293 = vmax.f32 %v239, 0.0
      %v294 = vmax.f32 %v240, 0.0
      %v295 = vmax.f32 %v241, 0.0
      %v296 = vmax.f32 %v242, 0.0
      %v297 = vmax.f32 %v243, 0.0
      %v298 = vmax.f32 %v244, 0.0
      %v299 = vmax.f32 %v245, 0.0
      %v300 = vmax.f32 %v246, 0.0
      %v301 = vmax.f32 %v247, 0.0
      %v302 = vmax.f32 %v248, 0.0
      %v303 = vmax.f32 %v249, 0.0
      %v304 = vmax.f32 %v250, 0.0
      %v305 = vmax.f32 %v251, 0.0
      %v306 = vmax.f32 %v252, 0.0
      %v307 = vmax.f32 %v253, 0.0
      %v308 = vmax.f32 %v254, 0.0
      %v309 = vmax.f32 %v255, 0.0
      %v310 = vmax.f32 %v256, 0.0
      %v311 = vmax.f32 %v257, 0.0
      %v312 = vmax.f32 %v258, 0.0
      %v313 = vmax.f32 %v259, 0.0
      %v314 = vmax.f32 %v260, 0.0
      %v315 = vmax.f32 %v261, 0.0
      %v316 = vmax.f32 %v262, 0.0
      %vm365 = vcmask 1046528
      %v366 = vrot.slane %v263, 1
      %v367 = vrot.slane %v264, 1
      %v368 = vsel %vm365, %v366, %v367
      %v369 = vrot.slane %v265, 1
      %v370 = vsel %vm365, %v367, %v369
      %v371 = vrot.slane %v266, 1
      %v372 = vrot.slane %v267, 1
      %v373 = vsel %vm365, %v371, %v372
      %v374 = vrot.slane %v268, 1
      %v375 = vsel %vm365, %v372, %v374
      %v376 = vrot.slane %v269, 1
      %v377 = vrot.slane %v270, 1
      %v378 = vsel %vm365, %v376, %v377
      %v379 = vrot.slane %v271, 1
      %v380 = vsel %vm365, %v377, %v379
      %v381 = vrot.slane %v272, 1
      %v382 = vrot.slane %v273, 1
      %v383 = vsel %vm365, %v381, %v382
      %v384 = vrot.slane %v274, 1
      %v385 = vsel %vm365, %v382, %v384
      %v386 = vrot.slane %v275, 1
      %v387 = vrot.slane %v276, 1
      %v388 = vsel %vm365, %v386, %v387
      %v389 = vrot.slane %v277, 1
      %v390 = vsel %vm365, %v387, %v389
      %v391 = vrot.slane %v278, 1
      %v392 = vrot.slane %v279, 1
      %v393 = vsel %vm365, %v391, %v392
      %v394 = vrot.slane %v280, 1
      %v395 = vsel %vm365, %v392, %v394
      %v396 = vrot.slane %v281, 1
      %v397 = vrot.slane %v282, 1
      %v398 = vsel %vm365, %v396, %v397
      %v399 = vrot.slane %v283, 1
      %v400 = vsel %vm365, %v397, %v399
      %v401 = vrot.slane %v284, 1
      %v402 = vrot.slane %v285, 1
      %v403 = vsel %vm365, %v401, %v402
      %v404 = vrot.slane %v286, 1
      %v405 = vsel %vm365, %v402, %v404
      %v406 = vrot.slane %v287, 1
      %v407 = vrot.slane %v288, 1
      %v408 = vsel %vm365, %v406, %v407
      %v409 = vrot.slane %v289, 1
      %v410 = vsel %vm365, %v407, %v409
      %v411 = vrot.slane %v290, 1
      %v412 = vrot.slane %v291, 1
      %v413 = vsel %vm365, %v411, %v412
      %v414 = vrot.slane %v292, 1
      %v415 = vsel %vm365, %v412, %v414
      %v416 = vrot.slane %v293, 1
      %v417 = vrot.slane %v294, 1
      %v418 = vsel %vm365, %v416, %v417
      %v419 = vrot.slane %v295, 1
      %v420 = vsel %vm365, %v417, %v419
      %v421 = vrot.slane %v296, 1
      %v422 = vrot.slane %v297, 1
      %v423 = vsel %vm365, %v421, %v422
      %v424 = vrot.slane %v298, 1
      %v425 = vsel %vm365, %v422, %v424
      %v426 = vrot.slane %v299, 1
      %v427 = vrot.slane %v300, 1
      %v428 = vsel %vm365, %v426, %v427
      %v429 = vrot.slane %v301, 1
      %v430 = vsel %vm365, %v427, %v429
      %v431 = vrot.slane %v302, 1
      %v432 = vrot.slane %v303, 1
      %v433 = vsel %vm365, %v431, %v432
      %v434 = vrot.slane %v304, 1
      %v435 = vsel %vm365, %v432, %v434
      %v436 = vrot.slane %v305, 1
      %v437 = vrot.slane %v306, 1
      %v438 = vsel %vm365, %v436, %v437
      %v439 = vrot.slane %v307, 1
      %v440 = vsel %vm365, %v437, %v439
      %v441 = vrot.slane %v308, 1
      %v442 = vrot.slane %v309, 1
      %v443 = vsel %vm365, %v441, %v442
      %v444 = vrot.slane %v310, 1
      %v445 = vsel %vm365, %v442, %v444
      %v449 = vrot.slane %v311, 1
      %v450 = vrot.slane %v312, 1
      %v451 = vsel %vm365, %v449, %v450
      %v452 = vrot.slane %v313, 1
      %v453 = vsel %vm365, %v450, %v452
      %v457 = vrot.slane %v314, 1
      %v458 = vrot.slane %v315, 1
      %v459 = vsel %vm365, %v457, %v458
      %v460 = vrot.slane %v316, 1
      %v461 = vsel %vm365, %v458, %v460
      %vm462 = vcmask 1045504
      %v463 = vrot.slane %v263, 2
      %v464 = vrot.slane %v264, 2
      %v465 = vsel %vm462, %v463, %v464
      %v466 = vrot.slane %v265, 2
      %v467 = vsel %vm462, %v464, %v466
      %v468 = vrot.slane %v266, 2
      %v469 = vrot.slane %v267, 2
      %v470 = vsel %vm462, %v468, %v469
      %v471 = vrot.slane %v268, 2
      %v472 = vsel %vm462, %v469, %v471
      %v473 = vrot.slane %v269, 2
      %v474 = vrot.slane %v270, 2
      %v475 = vsel %vm462, %v473, %v474
      %v476 = vrot.slane %v271, 2
      %v477 = vsel %vm462, %v474, %v476
      %v478 = vrot.slane %v272, 2
      %v479 = vrot.slane %v273, 2
      %v480 = vsel %vm462, %v478, %v479
      %v481 = vrot.slane %v274, 2
      %v482 = vsel %vm462, %v479, %v481
      %v483 = vrot.slane %v275, 2
      %v484 = vrot.slane %v276, 2
      %v485 = vsel %vm462, %v483, %v484
      %v486 = vrot.slane %v277, 2
      %v487 = vsel %vm462, %v484, %v486
      %v488 = vrot.slane %v278, 2
      %v489 = vrot.slane %v279, 2
      %v490 = vsel %vm462, %v488, %v489
      %v491 = vrot.slane %v280, 2
      %v492 = vsel %vm462, %v489, %v491
      %v493 = vrot.slane %v281, 2
      %v494 = vrot.slane %v282, 2
      %v495 = vsel %vm462, %v493, %v494
      %v496 = vrot.slane %v283, 2
      %v497 = vsel %vm462, %v494, %v496
      %v498 = vrot.slane %v284, 2
      %v499 = vrot.slane %v285, 2
      %v500 = vsel %vm462, %v498, %v499
      %v501 = vrot.slane %v286, 2
      %v502 = vsel %vm462, %v499, %v501
      %v503 = vrot.slane %v287, 2
      %v504 = vrot.slane %v288, 2
      %v505 = vsel %vm462, %v503, %v504
      %v506 = vrot.slane %v289, 2
      %v507 = vsel %vm462, %v504, %v506
      %v508 = vrot.slane %v290, 2
      %v509 = vrot.slane %v291, 2
      %v510 = vsel %vm462, %v508, %v509
      %v511 = vrot.slane %v292, 2
      %v512 = vsel %vm462, %v509, %v511
      %v513 = vrot.slane %v293, 2
      %v514 = vrot.slane %v294, 2
      %v515 = vsel %vm462, %v513, %v514
      %v516 = vrot.slane %v295, 2
      %v517 = vsel %vm462, %v514, %v516
      %v518 = vrot.slane %v296, 2
      %v519 = vrot.slane %v297, 2
      %v520 = vsel %vm462, %v518, %v519
      %v521 = vrot.slane %v298, 2
      %v522 = vsel %vm462, %v519, %v521
      %v523 = vrot.slane %v299, 2
      %v524 = vrot.slane %v300, 2
      %v525 = vsel %vm462, %v523, %v524
      %v526 = vrot.slane %v301, 2
      %v527 = vsel %vm462, %v524, %v526
      %v528 = vrot.slane %v302, 2
      %v529 = vrot.slane %v303, 2
      %v530 = vsel %vm462, %v528, %v529
      %v531 = vrot.slane %v304, 2
      %v532 = vsel %vm462, %v529, %v531
      %v533 = vrot.slane %v305, 2
      %v534 = vrot.slane %v306, 2
      %v535 = vsel %vm462, %v533, %v534
      %v536 = vrot.slane %v307, 2
      %v537 = vsel %vm462, %v534, %v536
      %v538 = vrot.slane %v308, 2
      %v539 = vrot.slane %v309, 2
      %v540 = vsel %vm462, %v538, %v539
      %v541 = vrot.slane %v310, 2
      %v542 = vsel %vm462, %v539, %v541
      %v543 = vrot.slane %v311, 2
      %v544 = vrot.slane %v312, 2
      %v545 = vsel %vm462, %v543, %v544
      %v546 = vrot.slane %v313, 2
      %v547 = vsel %vm462, %v544, %v546
      %v548 = vrot.slane %v314, 2
      %v549 = vrot.slane %v315, 2
      %v550 = vsel %vm462, %v548, %v549
      %v551 = vrot.slane %v316, 2
      %v552 = vsel %vm462, %v549, %v551
      %553 = vrot.lane.b32.xlu0 %v266, 4
      %v554 = vpop.permute.xlu0 %553
      %555 = vrot.lane.b32.xlu0 %v267, 4
      %v556 = vpop.permute.xlu0 %555
      %557 = vrot.lane.b32.xlu0 %v269, 4
      %v558 = vpop.permute.xlu0 %557
      %559 = vrot.lane.b32.xlu0 %v270, 4
      %v560 = vpop.permute.xlu0 %559
      %561 = vrot.lane.b32.xlu0 %v272, 4
      %v562 = vpop.permute.xlu0 %561
      %563 = vrot.lane.b32.xlu0 %v273, 4
      %v564 = vpop.permute.xlu0 %563
      %565 = vrot.lane.b32.xlu0 %v275, 4
      %v566 = vpop.permute.xlu0 %565
      %567 = vrot.lane.b32.xlu0 %v276, 4
      %v568 = vpop.permute.xlu0 %567
      %569 = vrot.lane.b32.xlu0 %v278, 4
      %v570 = vpop.permute.xlu0 %569
      %571 = vrot.lane.b32.xlu0 %v279, 4
      %v572 = vpop.permute.xlu0 %571
      %573 = vrot.lane.b32.xlu0 %v281, 4
      %v574 = vpop.permute.xlu0 %573
      %575 = vrot.lane.b32.xlu0 %v282, 4
      %v576 = vpop.permute.xlu0 %575
      %577 = vrot.lane.b32.xlu0 %v284, 4
      %v578 = vpop.permute.xlu0 %577
      %579 = vrot.lane.b32.xlu0 %v285, 4
      %v580 = vpop.permute.xlu0 %579
      %581 = vrot.lane.b32.xlu0 %v287, 4
      %v582 = vpop.permute.xlu0 %581
      %583 = vrot.lane.b32.xlu0 %v288, 4
      %v584 = vpop.permute.xlu0 %583
      %585 = vrot.lane.b32.xlu0 %v290, 4
      %v586 = vpop.permute.xlu0 %585
      %587 = vrot.lane.b32.xlu0 %v291, 4
      %v588 = vpop.permute.xlu0 %587
      %589 = vrot.lane.b32.xlu0 %v293, 4
      %v590 = vpop.permute.xlu0 %589
      %591 = vrot.lane.b32.xlu0 %v294, 4
      %v592 = vpop.permute.xlu0 %591
      %593 = vrot.lane.b32.xlu0 %v296, 4
      %v594 = vpop.permute.xlu0 %593
      %595 = vrot.lane.b32.xlu0 %v297, 4
      %v596 = vpop.permute.xlu0 %595
      %597 = vrot.lane.b32.xlu0 %v299, 4
      %v598 = vpop.permute.xlu0 %597
      %599 = vrot.lane.b32.xlu0 %v300, 4
      %v600 = vpop.permute.xlu0 %599
      %601 = vrot.lane.b32.xlu0 %v302, 4
      %v602 = vpop.permute.xlu0 %601
      %603 = vrot.lane.b32.xlu0 %v303, 4
      %v604 = vpop.permute.xlu0 %603
      %605 = vrot.lane.b32.xlu0 %v305, 4
      %v606 = vpop.permute.xlu0 %605
      %607 = vrot.lane.b32.xlu0 %v306, 4
      %v608 = vpop.permute.xlu0 %607
      %609 = vrot.lane.b32.xlu0 %v308, 4
      %v610 = vpop.permute.xlu0 %609
      %611 = vrot.lane.b32.xlu0 %v309, 4
      %v612 = vpop.permute.xlu0 %611
      %613 = vrot.lane.b32.xlu0 %v311, 4
      %v614 = vpop.permute.xlu0 %613
      %615 = vrot.lane.b32.xlu0 %v312, 4
      %v616 = vpop.permute.xlu0 %615
      %649 = vrot.lane.b32.xlu0 %v269, 8
      %v650 = vpop.permute.xlu0 %649
      %651 = vrot.lane.b32.xlu0 %v270, 8
      %v652 = vpop.permute.xlu0 %651
      %653 = vrot.lane.b32.xlu0 %v272, 8
      %v654 = vpop.permute.xlu0 %653
      %655 = vrot.lane.b32.xlu0 %v273, 8
      %v656 = vpop.permute.xlu0 %655
      %657 = vrot.lane.b32.xlu0 %v275, 8
      %v658 = vpop.permute.xlu0 %657
      %659 = vrot.lane.b32.xlu0 %v276, 8
      %v660 = vpop.permute.xlu0 %659
      %661 = vrot.lane.b32.xlu0 %v278, 8
      %v662 = vpop.permute.xlu0 %661
      %663 = vrot.lane.b32.xlu0 %v279, 8
      %v664 = vpop.permute.xlu0 %663
      %665 = vrot.lane.b32.xlu0 %v281, 8
      %v666 = vpop.permute.xlu0 %665
      %667 = vrot.lane.b32.xlu0 %v282, 8
      %v668 = vpop.permute.xlu0 %667
      %669 = vrot.lane.b32.xlu0 %v284, 8
      %v670 = vpop.permute.xlu0 %669
      %671 = vrot.lane.b32.xlu0 %v285, 8
      %v672 = vpop.permute.xlu0 %671
      %673 = vrot.lane.b32.xlu0 %v287, 8
      %v674 = vpop.permute.xlu0 %673
      %675 = vrot.lane.b32.xlu0 %v288, 8
      %v676 = vpop.permute.xlu0 %675
      %677 = vrot.lane.b32.xlu0 %v290, 8
      %v678 = vpop.permute.xlu0 %677
      %679 = vrot.lane.b32.xlu0 %v291, 8
      %v680 = vpop.permute.xlu0 %679
      %681 = vrot.lane.b32.xlu0 %v293, 8
      %v682 = vpop.permute.xlu0 %681
      %683 = vrot.lane.b32.xlu0 %v294, 8
      %v684 = vpop.permute.xlu0 %683
      %685 = vrot.lane.b32.xlu0 %v296, 8
      %v686 = vpop.permute.xlu0 %685
      %687 = vrot.lane.b32.xlu0 %v297, 8
      %v688 = vpop.permute.xlu0 %687
      %689 = vrot.lane.b32.xlu0 %v299, 8
      %v690 = vpop.permute.xlu0 %689
      %691 = vrot.lane.b32.xlu0 %v300, 8
      %v692 = vpop.permute.xlu0 %691
      %693 = vrot.lane.b32.xlu0 %v302, 8
      %v694 = vpop.permute.xlu0 %693
      %695 = vrot.lane.b32.xlu0 %v303, 8
      %v696 = vpop.permute.xlu0 %695
      %697 = vrot.lane.b32.xlu0 %v305, 8
      %v698 = vpop.permute.xlu0 %697
      %699 = vrot.lane.b32.xlu0 %v306, 8
      %v700 = vpop.permute.xlu0 %699
      %701 = vrot.lane.b32.xlu0 %v308, 8
      %v702 = vpop.permute.xlu0 %701
      %703 = vrot.lane.b32.xlu0 %v309, 8
      %v704 = vpop.permute.xlu0 %703
      %705 = vrot.lane.b32.xlu0 %v311, 8
      %v706 = vpop.permute.xlu0 %705
      %707 = vrot.lane.b32.xlu0 %v312, 8
      %v708 = vpop.permute.xlu0 %707
      %709 = vrot.lane.b32.xlu0 %v314, 8
      %v710 = vpop.permute.xlu0 %709
      %711 = vrot.lane.b32.xlu0 %v315, 8
      %v712 = vpop.permute.xlu0 %711
      %745 = vrot.lane.b32.xlu0 %v368, 12
      %v746 = vpop.permute.xlu0 %745
      %747 = vrot.lane.b32.xlu0 %v370, 12
      %v748 = vpop.permute.xlu0 %747
      %749 = vrot.lane.b32.xlu0 %v373, 12
      %v750 = vpop.permute.xlu0 %749
      %751 = vrot.lane.b32.xlu0 %v375, 12
      %v752 = vpop.permute.xlu0 %751
      %753 = vrot.lane.b32.xlu0 %v378, 12
      %v754 = vpop.permute.xlu0 %753
      %755 = vrot.lane.b32.xlu0 %v380, 12
      %v756 = vpop.permute.xlu0 %755
      %757 = vrot.lane.b32.xlu0 %v383, 12
      %v758 = vpop.permute.xlu0 %757
      %759 = vrot.lane.b32.xlu0 %v385, 12
      %v760 = vpop.permute.xlu0 %759
      %761 = vrot.lane.b32.xlu0 %v388, 12
      %v762 = vpop.permute.xlu0 %761
      %763 = vrot.lane.b32.xlu0 %v390, 12
      %v764 = vpop.permute.xlu0 %763
      %765 = vrot.lane.b32.xlu0 %v393, 12
      %v766 = vpop.permute.xlu0 %765
      %767 = vrot.lane.b32.xlu0 %v395, 12
      %v768 = vpop.permute.xlu0 %767
      %769 = vrot.lane.b32.xlu0 %v398, 12
      %v770 = vpop.permute.xlu0 %769
      %771 = vrot.lane.b32.xlu0 %v400, 12
      %v772 = vpop.permute.xlu0 %771
      %773 = vrot.lane.b32.xlu0 %v403, 12
      %v774 = vpop.permute.xlu0 %773
      %775 = vrot.lane.b32.xlu0 %v405, 12
      %v776 = vpop.permute.xlu0 %775
      %777 = vrot.lane.b32.xlu0 %v408, 12
      %v778 = vpop.permute.xlu0 %777
      %779 = vrot.lane.b32.xlu0 %v410, 12
      %v780 = vpop.permute.xlu0 %779
      %781 = vrot.lane.b32.xlu0 %v413, 12
      %v782 = vpop.permute.xlu0 %781
      %783 = vrot.lane.b32.xlu0 %v415, 12
      %v784 = vpop.permute.xlu0 %783
      %785 = vrot.lane.b32.xlu0 %v418, 12
      %v786 = vpop.permute.xlu0 %785
      %787 = vrot.lane.b32.xlu0 %v420, 12
      %v788 = vpop.permute.xlu0 %787
      %789 = vrot.lane.b32.xlu0 %v423, 12
      %v790 = vpop.permute.xlu0 %789
      %791 = vrot.lane.b32.xlu0 %v425, 12
      %v792 = vpop.permute.xlu0 %791
      %793 = vrot.lane.b32.xlu0 %v428, 12
      %v794 = vpop.permute.xlu0 %793
      %795 = vrot.lane.b32.xlu0 %v430, 12
      %v796 = vpop.permute.xlu0 %795
      %797 = vrot.lane.b32.xlu0 %v433, 12
      %v798 = vpop.permute.xlu0 %797
      %799 = vrot.lane.b32.xlu0 %v435, 12
      %v800 = vpop.permute.xlu0 %799
      %801 = vrot.lane.b32.xlu0 %v438, 12
      %v802 = vpop.permute.xlu0 %801
      %803 = vrot.lane.b32.xlu0 %v440, 12
      %v804 = vpop.permute.xlu0 %803
      %805 = vrot.lane.b32.xlu0 %v443, 12
      %v806 = vpop.permute.xlu0 %805
      %807 = vrot.lane.b32.xlu0 %v445, 12
      %v808 = vpop.permute.xlu0 %807
      %841 = vrot.lane.b32.xlu0 %v373, 16
      %v842 = vpop.permute.xlu0 %841
      %843 = vrot.lane.b32.xlu0 %v375, 16
      %v844 = vpop.permute.xlu0 %843
      %845 = vrot.lane.b32.xlu0 %v378, 16
      %v846 = vpop.permute.xlu0 %845
      %847 = vrot.lane.b32.xlu0 %v380, 16
      %v848 = vpop.permute.xlu0 %847
      %849 = vrot.lane.b32.xlu0 %v383, 16
      %v850 = vpop.permute.xlu0 %849
      %851 = vrot.lane.b32.xlu0 %v385, 16
      %v852 = vpop.permute.xlu0 %851
      %853 = vrot.lane.b32.xlu0 %v388, 16
      %v854 = vpop.permute.xlu0 %853
      %855 = vrot.lane.b32.xlu0 %v390, 16
      %v856 = vpop.permute.xlu0 %855
      %857 = vrot.lane.b32.xlu0 %v393, 16
      %v858 = vpop.permute.xlu0 %857
      %859 = vrot.lane.b32.xlu0 %v395, 16
      %v860 = vpop.permute.xlu0 %859
      %861 = vrot.lane.b32.xlu0 %v398, 16
      %v862 = vpop.permute.xlu0 %861
      %863 = vrot.lane.b32.xlu0 %v400, 16
      %v864 = vpop.permute.xlu0 %863
      %865 = vrot.lane.b32.xlu0 %v403, 16
      %v866 = vpop.permute.xlu0 %865
      %867 = vrot.lane.b32.xlu0 %v405, 16
      %v868 = vpop.permute.xlu0 %867
      %869 = vrot.lane.b32.xlu0 %v408, 16
      %v870 = vpop.permute.xlu0 %869
      %871 = vrot.lane.b32.xlu0 %v410, 16
      %v872 = vpop.permute.xlu0 %871
      %873 = vrot.lane.b32.xlu0 %v413, 16
      %v874 = vpop.permute.xlu0 %873
      %875 = vrot.lane.b32.xlu0 %v415, 16
      %v876 = vpop.permute.xlu0 %875
      %877 = vrot.lane.b32.xlu0 %v418, 16
      %v878 = vpop.permute.xlu0 %877
      %879 = vrot.lane.b32.xlu0 %v420, 16
      %v880 = vpop.permute.xlu0 %879
      %881 = vrot.lane.b32.xlu0 %v423, 16
      %v882 = vpop.permute.xlu0 %881
      %883 = vrot.lane.b32.xlu0 %v425, 16
      %v884 = vpop.permute.xlu0 %883
      %885 = vrot.lane.b32.xlu0 %v428, 16
      %v886 = vpop.permute.xlu0 %885
      %887 = vrot.lane.b32.xlu0 %v430, 16
      %v888 = vpop.permute.xlu0 %887
      %889 = vrot.lane.b32.xlu0 %v433, 16
      %v890 = vpop.permute.xlu0 %889
      %891 = vrot.lane.b32.xlu0 %v435, 16
      %v892 = vpop.permute.xlu0 %891
      %893 = vrot.lane.b32.xlu0 %v438, 16
      %v894 = vpop.permute.xlu0 %893
      %895 = vrot.lane.b32.xlu0 %v440, 16
      %v896 = vpop.permute.xlu0 %895
      %897 = vrot.lane.b32.xlu0 %v443, 16
      %v898 = vpop.permute.xlu0 %897
      %899 = vrot.lane.b32.xlu0 %v445, 16
      %v900 = vpop.permute.xlu0 %899
      %901 = vrot.lane.b32.xlu0 %v451, 16
      %v902 = vpop.permute.xlu0 %901
      %903 = vrot.lane.b32.xlu0 %v453, 16
      %v904 = vpop.permute.xlu0 %903
      %937 = vrot.lane.b32.xlu0 %v378, 20
      %v938 = vpop.permute.xlu0 %937
      %939 = vrot.lane.b32.xlu0 %v380, 20
      %v940 = vpop.permute.xlu0 %939
      %941 = vrot.lane.b32.xlu0 %v383, 20
      %v942 = vpop.permute.xlu0 %941
      %943 = vrot.lane.b32.xlu0 %v385, 20
      %v944 = vpop.permute.xlu0 %943
      %945 = vrot.lane.b32.xlu0 %v388, 20
      %v946 = vpop.permute.xlu0 %945
      %947 = vrot.lane.b32.xlu0 %v390, 20
      %v948 = vpop.permute.xlu0 %947
      %949 = vrot.lane.b32.xlu0 %v393, 20
      %v950 = vpop.permute.xlu0 %949
      %951 = vrot.lane.b32.xlu0 %v395, 20
      %v952 = vpop.permute.xlu0 %951
      %953 = vrot.lane.b32.xlu0 %v398, 20
      %v954 = vpop.permute.xlu0 %953
      %955 = vrot.lane.b32.xlu0 %v400, 20
      %v956 = vpop.permute.xlu0 %955
      %957 = vrot.lane.b32.xlu0 %v403, 20
      %v958 = vpop.permute.xlu0 %957
      %959 = vrot.lane.b32.xlu0 %v405, 20
      %v960 = vpop.permute.xlu0 %959
      %961 = vrot.lane.b32.xlu0 %v408, 20
      %v962 = vpop.permute.xlu0 %961
      %963 = vrot.lane.b32.xlu0 %v410, 20
      %v964 = vpop.permute.xlu0 %963
      %965 = vrot.lane.b32.xlu0 %v413, 20
      %v966 = vpop.permute.xlu0 %965
      %967 = vrot.lane.b32.xlu0 %v415, 20
      %v968 = vpop.permute.xlu0 %967
      %969 = vrot.lane.b32.xlu0 %v418, 20
      %v970 = vpop.permute.xlu0 %969
      %971 = vrot.lane.b32.xlu0 %v420, 20
      %v972 = vpop.permute.xlu0 %971
      %973 = vrot.lane.b32.xlu0 %v423, 20
      %v974 = vpop.permute.xlu0 %973
      %975 = vrot.lane.b32.xlu0 %v425, 20
      %v976 = vpop.permute.xlu0 %975
      %977 = vrot.lane.b32.xlu0 %v428, 20
      %v978 = vpop.permute.xlu0 %977
      %979 = vrot.lane.b32.xlu0 %v430, 20
      %v980 = vpop.permute.xlu0 %979
      %981 = vrot.lane.b32.xlu0 %v433, 20
      %v982 = vpop.permute.xlu0 %981
      %983 = vrot.lane.b32.xlu0 %v435, 20
      %v984 = vpop.permute.xlu0 %983
      %985 = vrot.lane.b32.xlu0 %v438, 20
      %v986 = vpop.permute.xlu0 %985
      %987 = vrot.lane.b32.xlu0 %v440, 20
      %v988 = vpop.permute.xlu0 %987
      %989 = vrot.lane.b32.xlu0 %v443, 20
      %v990 = vpop.permute.xlu0 %989
      %991 = vrot.lane.b32.xlu0 %v445, 20
      %v992 = vpop.permute.xlu0 %991
      %993 = vrot.lane.b32.xlu0 %v451, 20
      %v994 = vpop.permute.xlu0 %993
      %995 = vrot.lane.b32.xlu0 %v453, 20
      %v996 = vpop.permute.xlu0 %995
      %997 = vrot.lane.b32.xlu0 %v459, 20
      %v998 = vpop.permute.xlu0 %997
      %999 = vrot.lane.b32.xlu0 %v461, 20
      %v1000 = vpop.permute.xlu0 %999
      %1033 = vrot.lane.b32.xlu0 %v465, 24
      %v1034 = vpop.permute.xlu0 %1033
      %1035 = vrot.lane.b32.xlu0 %v467, 24
      %v1036 = vpop.permute.xlu0 %1035
      %1037 = vrot.lane.b32.xlu0 %v470, 24
      %v1038 = vpop.permute.xlu0 %1037
      %1039 = vrot.lane.b32.xlu0 %v472, 24
      %v1040 = vpop.permute.xlu0 %1039
      %1041 = vrot.lane.b32.xlu0 %v475, 24
      %v1042 = vpop.permute.xlu0 %1041
      %1043 = vrot.lane.b32.xlu0 %v477, 24
      %v1044 = vpop.permute.xlu0 %1043
      %1045 = vrot.lane.b32.xlu0 %v480, 24
      %v1046 = vpop.permute.xlu0 %1045
      %1047 = vrot.lane.b32.xlu0 %v482, 24
      %v1048 = vpop.permute.xlu0 %1047
      %1049 = vrot.lane.b32.xlu0 %v485, 24
      %v1050 = vpop.permute.xlu0 %1049
      %1051 = vrot.lane.b32.xlu0 %v487, 24
      %v1052 = vpop.permute.xlu0 %1051
      %1053 = vrot.lane.b32.xlu0 %v490, 24
      %v1054 = vpop.permute.xlu0 %1053
      %1055 = vrot.lane.b32.xlu0 %v492, 24
      %v1056 = vpop.permute.xlu0 %1055
      %1057 = vrot.lane.b32.xlu0 %v495, 24
      %v1058 = vpop.permute.xlu0 %1057
      %1059 = vrot.lane.b32.xlu0 %v497, 24
      %v1060 = vpop.permute.xlu0 %1059
      %1061 = vrot.lane.b32.xlu0 %v500, 24
      %v1062 = vpop.permute.xlu0 %1061
      %1063 = vrot.lane.b32.xlu0 %v502, 24
      %v1064 = vpop.permute.xlu0 %1063
      %1065 = vrot.lane.b32.xlu0 %v505, 24
      %v1066 = vpop.permute.xlu0 %1065
      %1067 = vrot.lane.b32.xlu0 %v507, 24
      %v1068 = vpop.permute.xlu0 %1067
      %1069 = vrot.lane.b32.xlu0 %v510, 24
      %v1070 = vpop.permute.xlu0 %1069
      %1071 = vrot.lane.b32.xlu0 %v512, 24
      %v1072 = vpop.permute.xlu0 %1071
      %1073 = vrot.lane.b32.xlu0 %v515, 24
      %v1074 = vpop.permute.xlu0 %1073
      %1075 = vrot.lane.b32.xlu0 %v517, 24
      %v1076 = vpop.permute.xlu0 %1075
      %1077 = vrot.lane.b32.xlu0 %v520, 24
      %v1078 = vpop.permute.xlu0 %1077
      %1079 = vrot.lane.b32.xlu0 %v522, 24
      %v1080 = vpop.permute.xlu0 %1079
      %1081 = vrot.lane.b32.xlu0 %v525, 24
      %v1082 = vpop.permute.xlu0 %1081
      %1083 = vrot.lane.b32.xlu0 %v527, 24
      %v1084 = vpop.permute.xlu0 %1083
      %1085 = vrot.lane.b32.xlu0 %v530, 24
      %v1086 = vpop.permute.xlu0 %1085
      %1087 = vrot.lane.b32.xlu0 %v532, 24
      %v1088 = vpop.permute.xlu0 %1087
      %1089 = vrot.lane.b32.xlu0 %v535, 24
      %v1090 = vpop.permute.xlu0 %1089
      %1091 = vrot.lane.b32.xlu0 %v537, 24
      %v1092 = vpop.permute.xlu0 %1091
      %1093 = vrot.lane.b32.xlu0 %v540, 24
      %v1094 = vpop.permute.xlu0 %1093
      %1095 = vrot.lane.b32.xlu0 %v542, 24
      %v1096 = vpop.permute.xlu0 %1095
      %1129 = vrot.lane.b32.xlu0 %v470, 28
      %v1130 = vpop.permute.xlu0 %1129
      %1131 = vrot.lane.b32.xlu0 %v472, 28
      %v1132 = vpop.permute.xlu0 %1131
      %1133 = vrot.lane.b32.xlu0 %v475, 28
      %v1134 = vpop.permute.xlu0 %1133
      %1135 = vrot.lane.b32.xlu0 %v477, 28
      %v1136 = vpop.permute.xlu0 %1135
      %1137 = vrot.lane.b32.xlu0 %v480, 28
      %v1138 = vpop.permute.xlu0 %1137
      %1139 = vrot.lane.b32.xlu0 %v482, 28
      %v1140 = vpop.permute.xlu0 %1139
      %1141 = vrot.lane.b32.xlu0 %v485, 28
      %v1142 = vpop.permute.xlu0 %1141
      %1143 = vrot.lane.b32.xlu0 %v487, 28
      %v1144 = vpop.permute.xlu0 %1143
      %1145 = vrot.lane.b32.xlu0 %v490, 28
      %v1146 = vpop.permute.xlu0 %1145
      %1147 = vrot.lane.b32.xlu0 %v492, 28
      %v1148 = vpop.permute.xlu0 %1147
      %1149 = vrot.lane.b32.xlu0 %v495, 28
      %v1150 = vpop.permute.xlu0 %1149
      %1151 = vrot.lane.b32.xlu0 %v497, 28
      %v1152 = vpop.permute.xlu0 %1151
      %1153 = vrot.lane.b32.xlu0 %v500, 28
      %v1154 = vpop.permute.xlu0 %1153
      %1155 = vrot.lane.b32.xlu0 %v502, 28
      %v1156 = vpop.permute.xlu0 %1155
      %1157 = vrot.lane.b32.xlu0 %v505, 28
      %v1158 = vpop.permute.xlu0 %1157
      %1159 = vrot.lane.b32.xlu0 %v507, 28
      %v1160 = vpop.permute.xlu0 %1159
      %1161 = vrot.lane.b32.xlu0 %v510, 28
      %v1162 = vpop.permute.xlu0 %1161
      %1163 = vrot.lane.b32.xlu0 %v512, 28
      %v1164 = vpop.permute.xlu0 %1163
      %1165 = vrot.lane.b32.xlu0 %v515, 28
      %v1166 = vpop.permute.xlu0 %1165
      %1167 = vrot.lane.b32.xlu0 %v517, 28
      %v1168 = vpop.permute.xlu0 %1167
      %1169 = vrot.lane.b32.xlu0 %v520, 28
      %v1170 = vpop.permute.xlu0 %1169
      %1171 = vrot.lane.b32.xlu0 %v522, 28
      %v1172 = vpop.permute.xlu0 %1171
      %1173 = vrot.lane.b32.xlu0 %v525, 28
      %v1174 = vpop.permute.xlu0 %1173
      %1175 = vrot.lane.b32.xlu0 %v527, 28
      %v1176 = vpop.permute.xlu0 %1175
      %1177 = vrot.lane.b32.xlu0 %v530, 28
      %v1178 = vpop.permute.xlu0 %1177
      %1179 = vrot.lane.b32.xlu0 %v532, 28
      %v1180 = vpop.permute.xlu0 %1179
      %1181 = vrot.lane.b32.xlu0 %v535, 28
      %v1182 = vpop.permute.xlu0 %1181
      %1183 = vrot.lane.b32.xlu0 %v537, 28
      %v1184 = vpop.permute.xlu0 %1183
      %1185 = vrot.lane.b32.xlu0 %v540, 28
      %v1186 = vpop.permute.xlu0 %1185
      %1187 = vrot.lane.b32.xlu0 %v542, 28
      %v1188 = vpop.permute.xlu0 %1187
      %1189 = vrot.lane.b32.xlu0 %v545, 28
      %v1190 = vpop.permute.xlu0 %1189
      %1191 = vrot.lane.b32.xlu0 %v547, 28
      %v1192 = vpop.permute.xlu0 %1191
      %1225 = vrot.lane.b32.xlu0 %v475, 32
      %v1226 = vpop.permute.xlu0 %1225
      %1227 = vrot.lane.b32.xlu0 %v477, 32
      %v1228 = vpop.permute.xlu0 %1227
      %1229 = vrot.lane.b32.xlu0 %v480, 32
      %v1230 = vpop.permute.xlu0 %1229
      %1231 = vrot.lane.b32.xlu0 %v482, 32
      %v1232 = vpop.permute.xlu0 %1231
      %1233 = vrot.lane.b32.xlu0 %v485, 32
      %v1234 = vpop.permute.xlu0 %1233
      %1235 = vrot.lane.b32.xlu0 %v487, 32
      %v1236 = vpop.permute.xlu0 %1235
      %1237 = vrot.lane.b32.xlu0 %v490, 32
      %v1238 = vpop.permute.xlu0 %1237
      %1239 = vrot.lane.b32.xlu0 %v492, 32
      %v1240 = vpop.permute.xlu0 %1239
      %1241 = vrot.lane.b32.xlu0 %v495, 32
      %v1242 = vpop.permute.xlu0 %1241
      %1243 = vrot.lane.b32.xlu0 %v497, 32
      %v1244 = vpop.permute.xlu0 %1243
      %1245 = vrot.lane.b32.xlu0 %v500, 32
      %v1246 = vpop.permute.xlu0 %1245
      %1247 = vrot.lane.b32.xlu0 %v502, 32
      %v1248 = vpop.permute.xlu0 %1247
      %1249 = vrot.lane.b32.xlu0 %v505, 32
      %v1250 = vpop.permute.xlu0 %1249
      %1251 = vrot.lane.b32.xlu0 %v507, 32
      %v1252 = vpop.permute.xlu0 %1251
      %1253 = vrot.lane.b32.xlu0 %v510, 32
      %v1254 = vpop.permute.xlu0 %1253
      %1255 = vrot.lane.b32.xlu0 %v512, 32
      %v1256 = vpop.permute.xlu0 %1255
      %1257 = vrot.lane.b32.xlu0 %v515, 32
      %v1258 = vpop.permute.xlu0 %1257
      %1259 = vrot.lane.b32.xlu0 %v517, 32
      %v1260 = vpop.permute.xlu0 %1259
      %1261 = vrot.lane.b32.xlu0 %v520, 32
      %v1262 = vpop.permute.xlu0 %1261
      %1263 = vrot.lane.b32.xlu0 %v522, 32
      %v1264 = vpop.permute.xlu0 %1263
      %1265 = vrot.lane.b32.xlu0 %v525, 32
      %v1266 = vpop.permute.xlu0 %1265
      %1267 = vrot.lane.b32.xlu0 %v527, 32
      %v1268 = vpop.permute.xlu0 %1267
      %1269 = vrot.lane.b32.xlu0 %v530, 32
      %v1270 = vpop.permute.xlu0 %1269
      %1271 = vrot.lane.b32.xlu0 %v532, 32
      %v1272 = vpop.permute.xlu0 %1271
      %1273 = vrot.lane.b32.xlu0 %v535, 32
      %v1274 = vpop.permute.xlu0 %1273
      %1275 = vrot.lane.b32.xlu0 %v537, 32
      %v1276 = vpop.permute.xlu0 %1275
      %1277 = vrot.lane.b32.xlu0 %v540, 32
      %v1278 = vpop.permute.xlu0 %1277
      %1279 = vrot.lane.b32.xlu0 %v542, 32
      %v1280 = vpop.permute.xlu0 %1279
      %1281 = vrot.lane.b32.xlu0 %v545, 32
      %v1282 = vpop.permute.xlu0 %1281
      %1283 = vrot.lane.b32.xlu0 %v547, 32
      %v1284 = vpop.permute.xlu0 %1283
      %1285 = vrot.lane.b32.xlu0 %v550, 32
      %v1286 = vpop.permute.xlu0 %1285
      %1287 = vrot.lane.b32.xlu0 %v552, 32
      %v1288 = vpop.permute.xlu0 %1287
      %vm1321 = vcmask 31744
      %v1322 = vsel %vm1321, %v263, %v554
      %v1323 = vsel %vm1321, %v264, %v556
      %v1324 = vsel %vm1321, %v266, %v558
      %v1325 = vsel %vm1321, %v267, %v560
      %v1326 = vsel %vm1321, %v269, %v562
      %v1327 = vsel %vm1321, %v270, %v564
      %v1328 = vsel %vm1321, %v272, %v566
      %v1329 = vsel %vm1321, %v273, %v568
      %v1330 = vsel %vm1321, %v275, %v570
      %v1331 = vsel %vm1321, %v276, %v572
      %v1332 = vsel %vm1321, %v278, %v574
      %v1333 = vsel %vm1321, %v279, %v576
      %v1334 = vsel %vm1321, %v281, %v578
      %v1335 = vsel %vm1321, %v282, %v580
      %v1336 = vsel %vm1321, %v284, %v582
      %v1337 = vsel %vm1321, %v285, %v584
      %v1338 = vsel %vm1321, %v287, %v586
      %v1339 = vsel %vm1321, %v288, %v588
      %v1340 = vsel %vm1321, %v290, %v590
      %v1341 = vsel %vm1321, %v291, %v592
      %v1342 = vsel %vm1321, %v293, %v594
      %v1343 = vsel %vm1321, %v294, %v596
      %v1344 = vsel %vm1321, %v296, %v598
      %v1345 = vsel %vm1321, %v297, %v600
      %v1346 = vsel %vm1321, %v299, %v602
      %v1347 = vsel %vm1321, %v300, %v604
      %v1348 = vsel %vm1321, %v302, %v606
      %v1349 = vsel %vm1321, %v303, %v608
      %v1350 = vsel %vm1321, %v305, %v610
      %v1351 = vsel %vm1321, %v306, %v612
      %v1352 = vsel %vm1321, %v308, %v614
      %v1353 = vsel %vm1321, %v309, %v616
      %vm1354 = vcmask 64512
      %v1355 = vsel %vm1354, %v1322, %v650
      %v1356 = vsel %vm1354, %v1323, %v652
      %v1357 = vsel %vm1354, %v1324, %v654
      %v1358 = vsel %vm1354, %v1325, %v656
      %v1359 = vsel %vm1354, %v1326, %v658
      %v1360 = vsel %vm1354, %v1327, %v660
      %v1361 = vsel %vm1354, %v1328, %v662
      %v1362 = vsel %vm1354, %v1329, %v664
      %v1363 = vsel %vm1354, %v1330, %v666
      %v1364 = vsel %vm1354, %v1331, %v668
      %v1365 = vsel %vm1354, %v1332, %v670
      %v1366 = vsel %vm1354, %v1333, %v672
      %v1367 = vsel %vm1354, %v1334, %v674
      %v1368 = vsel %vm1354, %v1335, %v676
      %v1369 = vsel %vm1354, %v1336, %v678
      %v1370 = vsel %vm1354, %v1337, %v680
      %v1371 = vsel %vm1354, %v1338, %v682
      %v1372 = vsel %vm1354, %v1339, %v684
      %v1373 = vsel %vm1354, %v1340, %v686
      %v1374 = vsel %vm1354, %v1341, %v688
      %v1375 = vsel %vm1354, %v1342, %v690
      %v1376 = vsel %vm1354, %v1343, %v692
      %v1377 = vsel %vm1354, %v1344, %v694
      %v1378 = vsel %vm1354, %v1345, %v696
      %v1379 = vsel %vm1354, %v1346, %v698
      %v1380 = vsel %vm1354, %v1347, %v700
      %v1381 = vsel %vm1354, %v1348, %v702
      %v1382 = vsel %vm1354, %v1349, %v704
      %v1383 = vsel %vm1354, %v1350, %v706
      %v1384 = vsel %vm1354, %v1351, %v708
      %v1385 = vsel %vm1354, %v1352, %v710
      %v1386 = vsel %vm1354, %v1353, %v712
      %vm1387 = vcmask 97280
      %v1388 = vsel %vm1387, %v1355, %v746
      %v1389 = vsel %vm1387, %v1356, %v748
      %v1390 = vsel %vm1387, %v1357, %v750
      %v1391 = vsel %vm1387, %v1358, %v752
      %v1392 = vsel %vm1387, %v1359, %v754
      %v1393 = vsel %vm1387, %v1360, %v756
      %v1394 = vsel %vm1387, %v1361, %v758
      %v1395 = vsel %vm1387, %v1362, %v760
      %v1396 = vsel %vm1387, %v1363, %v762
      %v1397 = vsel %vm1387, %v1364, %v764
      %v1398 = vsel %vm1387, %v1365, %v766
      %v1399 = vsel %vm1387, %v1366, %v768
      %v1400 = vsel %vm1387, %v1367, %v770
      %v1401 = vsel %vm1387, %v1368, %v772
      %v1402 = vsel %vm1387, %v1369, %v774
      %v1403 = vsel %vm1387, %v1370, %v776
      %v1404 = vsel %vm1387, %v1371, %v778
      %v1405 = vsel %vm1387, %v1372, %v780
      %v1406 = vsel %vm1387, %v1373, %v782
      %v1407 = vsel %vm1387, %v1374, %v784
      %v1408 = vsel %vm1387, %v1375, %v786
      %v1409 = vsel %vm1387, %v1376, %v788
      %v1410 = vsel %vm1387, %v1377, %v790
      %v1411 = vsel %vm1387, %v1378, %v792
      %v1412 = vsel %vm1387, %v1379, %v794
      %v1413 = vsel %vm1387, %v1380, %v796
      %v1414 = vsel %vm1387, %v1381, %v798
      %v1415 = vsel %vm1387, %v1382, %v800
      %v1416 = vsel %vm1387, %v1383, %v802
      %v1417 = vsel %vm1387, %v1384, %v804
      %v1418 = vsel %vm1387, %v1385, %v806
      %v1419 = vsel %vm1387, %v1386, %v808
      %vm1420 = vcmask 130048
      %v1421 = vsel %vm1420, %v1388, %v842
      %v1422 = vsel %vm1420, %v1389, %v844
      %v1423 = vsel %vm1420, %v1390, %v846
      %v1424 = vsel %vm1420, %v1391, %v848
      %v1425 = vsel %vm1420, %v1392, %v850
      %v1426 = vsel %vm1420, %v1393, %v852
      %v1427 = vsel %vm1420, %v1394, %v854
      %v1428 = vsel %vm1420, %v1395, %v856
      %v1429 = vsel %vm1420, %v1396, %v858
      %v1430 = vsel %vm1420, %v1397, %v860
      %v1431 = vsel %vm1420, %v1398, %v862
      %v1432 = vsel %vm1420, %v1399, %v864
      %v1433 = vsel %vm1420, %v1400, %v866
      %v1434 = vsel %vm1420, %v1401, %v868
      %v1435 = vsel %vm1420, %v1402, %v870
      %v1436 = vsel %vm1420, %v1403, %v872
      %v1437 = vsel %vm1420, %v1404, %v874
      %v1438 = vsel %vm1420, %v1405, %v876
      %v1439 = vsel %vm1420, %v1406, %v878
      %v1440 = vsel %vm1420, %v1407, %v880
      %v1441 = vsel %vm1420, %v1408, %v882
      %v1442 = vsel %vm1420, %v1409, %v884
      %v1443 = vsel %vm1420, %v1410, %v886
      %v1444 = vsel %vm1420, %v1411, %v888
      %v1445 = vsel %vm1420, %v1412, %v890
      %v1446 = vsel %vm1420, %v1413, %v892
      %v1447 = vsel %vm1420, %v1414, %v894
      %v1448 = vsel %vm1420, %v1415, %v896
      %v1449 = vsel %vm1420, %v1416, %v898
      %v1450 = vsel %vm1420, %v1417, %v900
      %v1451 = vsel %vm1420, %v1418, %v902
      %v1452 = vsel %vm1420, %v1419, %v904
      %vm1453 = vcmask 162816
      %v1454 = vsel %vm1453, %v1421, %v938
      %v1455 = vsel %vm1453, %v1422, %v940
      %v1456 = vsel %vm1453, %v1423, %v942
      %v1457 = vsel %vm1453, %v1424, %v944
      %v1458 = vsel %vm1453, %v1425, %v946
      %v1459 = vsel %vm1453, %v1426, %v948
      %v1460 = vsel %vm1453, %v1427, %v950
      %v1461 = vsel %vm1453, %v1428, %v952
      %v1462 = vsel %vm1453, %v1429, %v954
      %v1463 = vsel %vm1453, %v1430, %v956
      %v1464 = vsel %vm1453, %v1431, %v958
      %v1465 = vsel %vm1453, %v1432, %v960
      %v1466 = vsel %vm1453, %v1433, %v962
      %v1467 = vsel %vm1453, %v1434, %v964
      %v1468 = vsel %vm1453, %v1435, %v966
      %v1469 = vsel %vm1453, %v1436, %v968
      %v1470 = vsel %vm1453, %v1437, %v970
      %v1471 = vsel %vm1453, %v1438, %v972
      %v1472 = vsel %vm1453, %v1439, %v974
      %v1473 = vsel %vm1453, %v1440, %v976
      %v1474 = vsel %vm1453, %v1441, %v978
      %v1475 = vsel %vm1453, %v1442, %v980
      %v1476 = vsel %vm1453, %v1443, %v982
      %v1477 = vsel %vm1453, %v1444, %v984
      %v1478 = vsel %vm1453, %v1445, %v986
      %v1479 = vsel %vm1453, %v1446, %v988
      %v1480 = vsel %vm1453, %v1447, %v990
      %v1481 = vsel %vm1453, %v1448, %v992
      %v1482 = vsel %vm1453, %v1449, %v994
      %v1483 = vsel %vm1453, %v1450, %v996
      %v1484 = vsel %vm1453, %v1451, %v998
      %v1485 = vsel %vm1453, %v1452, %v1000
      %vm1486 = vcmask 195584
      %v1487 = vsel %vm1486, %v1454, %v1034
      %v1488 = vsel %vm1486, %v1455, %v1036
      %v1489 = vsel %vm1486, %v1456, %v1038
      %v1490 = vsel %vm1486, %v1457, %v1040
      %v1491 = vsel %vm1486, %v1458, %v1042
      %v1492 = vsel %vm1486, %v1459, %v1044
      %v1493 = vsel %vm1486, %v1460, %v1046
      %v1494 = vsel %vm1486, %v1461, %v1048
      %v1495 = vsel %vm1486, %v1462, %v1050
      %v1496 = vsel %vm1486, %v1463, %v1052
      %v1497 = vsel %vm1486, %v1464, %v1054
      %v1498 = vsel %vm1486, %v1465, %v1056
      %v1499 = vsel %vm1486, %v1466, %v1058
      %v1500 = vsel %vm1486, %v1467, %v1060
      %v1501 = vsel %vm1486, %v1468, %v1062
      %v1502 = vsel %vm1486, %v1469, %v1064
      %v1503 = vsel %vm1486, %v1470, %v1066
      %v1504 = vsel %vm1486, %v1471, %v1068
      %v1505 = vsel %vm1486, %v1472, %v1070
      %v1506 = vsel %vm1486, %v1473, %v1072
      %v1507 = vsel %vm1486, %v1474, %v1074
      %v1508 = vsel %vm1486, %v1475, %v1076
      %v1509 = vsel %vm1486, %v1476, %v1078
      %v1510 = vsel %vm1486, %v1477, %v1080
      %v1511 = vsel %vm1486, %v1478, %v1082
      %v1512 = vsel %vm1486, %v1479, %v1084
      %v1513 = vsel %vm1486, %v1480, %v1086
      %v1514 = vsel %vm1486, %v1481, %v1088
      %v1515 = vsel %vm1486, %v1482, %v1090
      %v1516 = vsel %vm1486, %v1483, %v1092
      %v1517 = vsel %vm1486, %v1484, %v1094
      %v1518 = vsel %vm1486, %v1485, %v1096
      %vm1519 = vcmask 228352
      %v1520 = vsel %vm1519, %v1487, %v1130
      %v1521 = vsel %vm1519, %v1488, %v1132
      %v1522 = vsel %vm1519, %v1489, %v1134
      %v1523 = vsel %vm1519, %v1490, %v1136
      %v1524 = vsel %vm1519, %v1491, %v1138
      %v1525 = vsel %vm1519, %v1492, %v1140
      %v1526 = vsel %vm1519, %v1493, %v1142
      %v1527 = vsel %vm1519, %v1494, %v1144
      %v1528 = vsel %vm1519, %v1495, %v1146
      %v1529 = vsel %vm1519, %v1496, %v1148
      %v1530 = vsel %vm1519, %v1497, %v1150
      %v1531 = vsel %vm1519, %v1498, %v1152
      %v1532 = vsel %vm1519, %v1499, %v1154
      %v1533 = vsel %vm1519, %v1500, %v1156
      %v1534 = vsel %vm1519, %v1501, %v1158
      %v1535 = vsel %vm1519, %v1502, %v1160
      %v1536 = vsel %vm1519, %v1503, %v1162
      %v1537 = vsel %vm1519, %v1504, %v1164
      %v1538 = vsel %vm1519, %v1505, %v1166
      %v1539 = vsel %vm1519, %v1506, %v1168
      %v1540 = vsel %vm1519, %v1507, %v1170
      %v1541 = vsel %vm1519, %v1508, %v1172
      %v1542 = vsel %vm1519, %v1509, %v1174
      %v1543 = vsel %vm1519, %v1510, %v1176
      %v1544 = vsel %vm1519, %v1511, %v1178
      %v1545 = vsel %vm1519, %v1512, %v1180
      %v1546 = vsel %vm1519, %v1513, %v1182
      %v1547 = vsel %vm1519, %v1514, %v1184
      %v1548 = vsel %vm1519, %v1515, %v1186
      %v1549 = vsel %vm1519, %v1516, %v1188
      %v1550 = vsel %vm1519, %v1517, %v1190
      %v1551 = vsel %vm1519, %v1518, %v1192
      %vm1552 = vcmask 261120
      %v1553 = vsel %vm1552, %v1520, %v1226
      %v1554 = vsel %vm1552, %v1521, %v1228
      %v1555 = vsel %vm1552, %v1522, %v1230
      %v1556 = vsel %vm1552, %v1523, %v1232
      %v1557 = vsel %vm1552, %v1524, %v1234
      %v1558 = vsel %vm1552, %v1525, %v1236
      %v1559 = vsel %vm1552, %v1526, %v1238
      %v1560 = vsel %vm1552, %v1527, %v1240
      %v1561 = vsel %vm1552, %v1528, %v1242
      %v1562 = vsel %vm1552, %v1529, %v1244
      %v1563 = vsel %vm1552, %v1530, %v1246
      %v1564 = vsel %vm1552, %v1531, %v1248
      %v1565 = vsel %vm1552, %v1532, %v1250
      %v1566 = vsel %vm1552, %v1533, %v1252
      %v1567 = vsel %vm1552, %v1534, %v1254
      %v1568 = vsel %vm1552, %v1535, %v1256
      %v1569 = vsel %vm1552, %v1536, %v1258
      %v1570 = vsel %vm1552, %v1537, %v1260
      %v1571 = vsel %vm1552, %v1538, %v1262
      %v1572 = vsel %vm1552, %v1539, %v1264
      %v1573 = vsel %vm1552, %v1540, %v1266
      %v1574 = vsel %vm1552, %v1541, %v1268
      %v1575 = vsel %vm1552, %v1542, %v1270
      %v1576 = vsel %vm1552, %v1543, %v1272
      %v1577 = vsel %vm1552, %v1544, %v1274
      %v1578 = vsel %vm1552, %v1545, %v1276
      %v1579 = vsel %vm1552, %v1546, %v1278
      %v1580 = vsel %vm1552, %v1547, %v1280
      %v1581 = vsel %vm1552, %v1548, %v1282
      %v1582 = vsel %vm1552, %v1549, %v1284
      %v1583 = vsel %vm1552, %v1550, %v1286
      %v1584 = vsel %vm1552, %v1551, %v1288
      %v1585 = vpack.c.bf16 %v1554, %v1553
      %v1586 = vpack.c.bf16 %v1556, %v1555
      %v1587 = vpack.c.bf16 %v1558, %v1557
      %v1588 = vpack.c.bf16 %v1560, %v1559
      %v1589 = vpack.c.bf16 %v1562, %v1561
      %v1590 = vpack.c.bf16 %v1564, %v1563
      %v1591 = vpack.c.bf16 %v1566, %v1565
      %v1592 = vpack.c.bf16 %v1568, %v1567
      %v1593 = vpack.c.bf16 %v1570, %v1569
      %v1594 = vpack.c.bf16 %v1572, %v1571
      %v1595 = vpack.c.bf16 %v1574, %v1573
      %v1596 = vpack.c.bf16 %v1576, %v1575
      %v1597 = vpack.c.bf16 %v1578, %v1577
      %v1598 = vpack.c.bf16 %v1580, %v1579
      %v1599 = vpack.c.bf16 %v1582, %v1581
      %v1600 = vpack.c.bf16 %v1584, %v1583
      %v1601 = vld [vmem:[%s1] sm:$0xf]
      %v1602 = vld [vmem:[%s1 + $0x4] sm:$0xf]
      %v1603 = vld [vmem:[%s1 + $0x8] sm:$0xf]
      %v1604 = vld [vmem:[%s1 + $0xc] sm:$0xf]
      %v1605 = vld [vmem:[%s1 + $0x10] sm:$0x3]
      %v1606 = vld [vmem:[%s2] sm:$0x1]
      %v1608 = vperm.slane %v1606, 0
      %v1615 = vunpack.c.l.b16 %v1601
      %v1616 = vunpack.c.l.b16 %v1602
      %v1617 = vunpack.c.l.b16 %v1603
      %v1618 = vunpack.c.l.b16 %v1604
      %v1619 = vunpack.c.l.b16 %v1605
      %v1620 = vpack.c.b16 %v1616, %v1615
      %v1621 = vpack.c.b16 %v1618, %v1617
      %v1622 = vpack.c.b16 %v1619, %v1619
      %vm1625 = vcmask 293888
      %v1627 = vsel %vm1625, %v1585, 0
      %v1630 = vsel %vm1625, %v1586, 0
      %v1633 = vsel %vm1625, %v1587, 0
      %v1636 = vsel %vm1625, %v1588, 0
      %v1639 = vsel %vm1625, %v1589, 0
      %v1642 = vsel %vm1625, %v1590, 0
      %v1645 = vsel %vm1625, %v1591, 0
      %v1648 = vsel %vm1625, %v1592, 0
      %v1651 = vsel %vm1625, %v1593, 0
      %v1654 = vsel %vm1625, %v1594, 0
      %v1657 = vsel %vm1625, %v1595, 0
      %v1660 = vsel %vm1625, %v1596, 0
      %v1663 = vsel %vm1625, %v1597, 0
      %v1666 = vsel %vm1625, %v1598, 0
      %v1669 = vsel %vm1625, %v1599, 0
      %v1672 = vsel %vm1625, %v1600, 0
      %vm1674 = vcmask 1041408
      %v1676 = vsel %vm1674, %v1622, 0
      %1678 = vmatpush.bf16.msra.mxu0 0
      %1679 = vmatpush.bf16.msra.mxu0 0
      %1680 = vmatpush.bf16.msra.mxu0 0
      %1681 = vmatpush.bf16.msra.mxu0 0
      %1682 = vmatpush.bf16.msra.mxu0 0
      %1683 = vmatpush.bf16.msra.mxu0 %v1676
      %1684 = vmatpush.bf16.msra.mxu0 %v1621
      %1685 = vmatpush.bf16.msra.mxu0 %v1620
      %1686 = vmatmul.bf16.gmra.mxu0 %v1627
      %v1687 = vpop.f32.mrf.mxu0
      %v1688 = vadd.f32 %v1608, %v1687
      %v1689 = vpop.f32.mrf.mxu0
      %v1690 = vadd.f32 %v1608, %v1689
      %1691 = vmatmul.bf16.gmra.mxu0 %v1630
      %v1692 = vpop.f32.mrf.mxu0
      %v1693 = vadd.f32 %v1608, %v1692
      %v1694 = vpop.f32.mrf.mxu0
      %v1695 = vadd.f32 %v1608, %v1694
      %1696 = vmatmul.bf16.gmra.mxu0 %v1633
      %v1697 = vpop.f32.mrf.mxu0
      %v1698 = vadd.f32 %v1608, %v1697
      %v1699 = vpop.f32.mrf.mxu0
      %v1700 = vadd.f32 %v1608, %v1699
      %1701 = vmatmul.bf16.gmra.mxu0 %v1636
      %v1702 = vpop.f32.mrf.mxu0
      %v1703 = vadd.f32 %v1608, %v1702
      %v1704 = vpop.f32.mrf.mxu0
      %v1705 = vadd.f32 %v1608, %v1704
      %1706 = vmatmul.bf16.gmra.mxu0 %v1639
      %v1707 = vpop.f32.mrf.mxu0
      %v1708 = vadd.f32 %v1608, %v1707
      %v1709 = vpop.f32.mrf.mxu0
      %v1710 = vadd.f32 %v1608, %v1709
      %1711 = vmatmul.bf16.gmra.mxu0 %v1642
      %v1712 = vpop.f32.mrf.mxu0
      %v1713 = vadd.f32 %v1608, %v1712
      %v1714 = vpop.f32.mrf.mxu0
      %v1715 = vadd.f32 %v1608, %v1714
      %1716 = vmatmul.bf16.gmra.mxu0 %v1645
      %v1717 = vpop.f32.mrf.mxu0
      %v1718 = vadd.f32 %v1608, %v1717
      %v1719 = vpop.f32.mrf.mxu0
      %v1720 = vadd.f32 %v1608, %v1719
      %1721 = vmatmul.bf16.gmra.mxu0 %v1648
      %v1722 = vpop.f32.mrf.mxu0
      %v1723 = vadd.f32 %v1608, %v1722
      %v1724 = vpop.f32.mrf.mxu0
      %v1725 = vadd.f32 %v1608, %v1724
      %1726 = vmatmul.bf16.gmra.mxu0 %v1651
      %v1727 = vpop.f32.mrf.mxu0
      %v1728 = vadd.f32 %v1608, %v1727
      %v1729 = vpop.f32.mrf.mxu0
      %v1730 = vadd.f32 %v1608, %v1729
      %1731 = vmatmul.bf16.gmra.mxu0 %v1654
      %v1732 = vpop.f32.mrf.mxu0
      %v1733 = vadd.f32 %v1608, %v1732
      %v1734 = vpop.f32.mrf.mxu0
      %v1735 = vadd.f32 %v1608, %v1734
      %1736 = vmatmul.bf16.gmra.mxu0 %v1657
      %v1737 = vpop.f32.mrf.mxu0
      %v1738 = vadd.f32 %v1608, %v1737
      %v1739 = vpop.f32.mrf.mxu0
      %v1740 = vadd.f32 %v1608, %v1739
      %1741 = vmatmul.bf16.gmra.mxu0 %v1660
      %v1742 = vpop.f32.mrf.mxu0
      %v1743 = vadd.f32 %v1608, %v1742
      %v1744 = vpop.f32.mrf.mxu0
      %v1745 = vadd.f32 %v1608, %v1744
      %1746 = vmatmul.bf16.gmra.mxu0 %v1663
      %v1747 = vpop.f32.mrf.mxu0
      %v1748 = vadd.f32 %v1608, %v1747
      %v1749 = vpop.f32.mrf.mxu0
      %v1750 = vadd.f32 %v1608, %v1749
      %1751 = vmatmul.bf16.gmra.mxu0 %v1666
      %v1752 = vpop.f32.mrf.mxu0
      %v1753 = vadd.f32 %v1608, %v1752
      %v1754 = vpop.f32.mrf.mxu0
      %v1755 = vadd.f32 %v1608, %v1754
      %1756 = vmatmul.bf16.gmra.mxu0 %v1669
      %v1757 = vpop.f32.mrf.mxu0
      %v1758 = vadd.f32 %v1608, %v1757
      %v1759 = vpop.f32.mrf.mxu0
      %v1760 = vadd.f32 %v1608, %v1759
      %1761 = vmatmul.bf16.gmra.mxu0 %v1672
      %v1762 = vpop.f32.mrf.mxu0
      %v1763 = vadd.f32 %v1608, %v1762
      %v1764 = vpop.f32.mrf.mxu0
      %v1765 = vadd.f32 %v1608, %v1764
      %1766 = vdwg.mxu0
      %1769 = vrot.lane.b32.xlu0 %v1693, 8
      %v1770 = vpop.permute.xlu0 %1769
      %1771 = vrot.lane.b32.xlu0 %v1695, 8
      %v1772 = vpop.permute.xlu0 %1771
      %1777 = vrot.lane.b32.xlu0 %v1698, 16
      %v1778 = vpop.permute.xlu0 %1777
      %1779 = vrot.lane.b32.xlu0 %v1700, 16
      %v1780 = vpop.permute.xlu0 %1779
      %1785 = vrot.lane.b32.xlu0 %v1703, 24
      %v1786 = vpop.permute.xlu0 %1785
      %1787 = vrot.lane.b32.xlu0 %v1705, 24
      %v1788 = vpop.permute.xlu0 %1787
      %1793 = vrot.lane.b32.xlu0 %v1708, 32
      %v1794 = vpop.permute.xlu0 %1793
      %1795 = vrot.lane.b32.xlu0 %v1710, 32
      %v1796 = vpop.permute.xlu0 %1795
      %1801 = vrot.lane.b32.xlu0 %v1713, 40
      %v1802 = vpop.permute.xlu0 %1801
      %1803 = vrot.lane.b32.xlu0 %v1715, 40
      %v1804 = vpop.permute.xlu0 %1803
      %1809 = vrot.lane.b32.xlu0 %v1718, 48
      %v1810 = vpop.permute.xlu0 %1809
      %1811 = vrot.lane.b32.xlu0 %v1720, 48
      %v1812 = vpop.permute.xlu0 %1811
      %1817 = vrot.lane.b32.xlu0 %v1723, 56
      %v1818 = vpop.permute.xlu0 %1817
      %1819 = vrot.lane.b32.xlu0 %v1725, 56
      %v1820 = vpop.permute.xlu0 %1819
      %1825 = vrot.lane.b32.xlu0 %v1728, 64
      %v1826 = vpop.permute.xlu0 %1825
      %1827 = vrot.lane.b32.xlu0 %v1730, 64
      %v1828 = vpop.permute.xlu0 %1827
      %1833 = vrot.lane.b32.xlu0 %v1733, 72
      %v1834 = vpop.permute.xlu0 %1833
      %1835 = vrot.lane.b32.xlu0 %v1735, 72
      %v1836 = vpop.permute.xlu0 %1835
      %1841 = vrot.lane.b32.xlu0 %v1738, 80
      %v1842 = vpop.permute.xlu0 %1841
      %1843 = vrot.lane.b32.xlu0 %v1740, 80
      %v1844 = vpop.permute.xlu0 %1843
      %1849 = vrot.lane.b32.xlu0 %v1743, 88
      %v1850 = vpop.permute.xlu0 %1849
      %1851 = vrot.lane.b32.xlu0 %v1745, 88
      %v1852 = vpop.permute.xlu0 %1851
      %1857 = vrot.lane.b32.xlu0 %v1748, 96
      %v1858 = vpop.permute.xlu0 %1857
      %1859 = vrot.lane.b32.xlu0 %v1750, 96
      %v1860 = vpop.permute.xlu0 %1859
      %1865 = vrot.lane.b32.xlu0 %v1753, 104
      %v1866 = vpop.permute.xlu0 %1865
      %1867 = vrot.lane.b32.xlu0 %v1755, 104
      %v1868 = vpop.permute.xlu0 %1867
      %1873 = vrot.lane.b32.xlu0 %v1758, 112
      %v1874 = vpop.permute.xlu0 %1873
      %1875 = vrot.lane.b32.xlu0 %v1760, 112
      %v1876 = vpop.permute.xlu0 %1875
      %1881 = vrot.lane.b32.xlu0 %v1763, 120
      %v1882 = vpop.permute.xlu0 %1881
      %1883 = vrot.lane.b32.xlu0 %v1765, 120
      %v1884 = vpop.permute.xlu0 %1883
      %v1887 = vsel %vm1354, %v1688, %v1770
      %v1888 = vsel %vm1354, %v1690, %v1772
      %v1889 = vsel %vm1420, %v1887, %v1778
      %v1890 = vsel %vm1420, %v1888, %v1780
      %v1891 = vsel %vm1486, %v1889, %v1786
      %v1892 = vsel %vm1486, %v1890, %v1788
      %v1893 = vsel %vm1552, %v1891, %v1794
      %v1894 = vsel %vm1552, %v1892, %v1796
      %vm1895 = vcmask 326656
      %v1896 = vsel %vm1895, %v1893, %v1802
      %v1897 = vsel %vm1895, %v1894, %v1804
      %vm1898 = vcmask 392192
      %v1899 = vsel %vm1898, %v1896, %v1810
      %v1900 = vsel %vm1898, %v1897, %v1812
      %vm1901 = vcmask 457728
      %v1902 = vsel %vm1901, %v1899, %v1818
      %v1903 = vsel %vm1901, %v1900, %v1820
      %vm1904 = vcmask 523264
      %v1905 = vsel %vm1904, %v1902, %v1826
      %v1906 = vsel %vm1904, %v1903, %v1828
      %vm1907 = vcmask 588800
      %v1908 = vsel %vm1907, %v1905, %v1834
      %v1909 = vsel %vm1907, %v1906, %v1836
      %vm1910 = vcmask 654336
      %v1911 = vsel %vm1910, %v1908, %v1842
      %v1912 = vsel %vm1910, %v1909, %v1844
      %vm1913 = vcmask 719872
      %v1914 = vsel %vm1913, %v1911, %v1850
      %v1915 = vsel %vm1913, %v1912, %v1852
      %vm1916 = vcmask 785408
      %v1917 = vsel %vm1916, %v1914, %v1858
      %v1918 = vsel %vm1916, %v1915, %v1860
      %vm1919 = vcmask 850944
      %v1920 = vsel %vm1919, %v1917, %v1866
      %v1921 = vsel %vm1919, %v1918, %v1868
      %vm1922 = vcmask 916480
      %v1923 = vsel %vm1922, %v1920, %v1874
      %v1924 = vsel %vm1922, %v1921, %v1876
      %vm1925 = vcmask 982016
      %v1926 = vsel %vm1925, %v1923, %v1882
      %v1927 = vsel %vm1925, %v1924, %v1884
      %1928 = vst [vmem:[%s206] sm:$0xff] %v1926
      %1929 = vst [vmem:[%s206 + $0x8] sm:$0xff] %v1927
      %1932 = vrot.lane.b32.xlu0 %v1688, 120
      %v1933 = vpop.permute.xlu0 %1932
      %1934 = vrot.lane.b32.xlu0 %v1690, 120
      %v1935 = vpop.permute.xlu0 %1934
      %1938 = vrot.lane.b32.xlu0 %v1698, 8
      %v1939 = vpop.permute.xlu0 %1938
      %1940 = vrot.lane.b32.xlu0 %v1700, 8
      %v1941 = vpop.permute.xlu0 %1940
      %1944 = vrot.lane.b32.xlu0 %v1703, 16
      %v1945 = vpop.permute.xlu0 %1944
      %1946 = vrot.lane.b32.xlu0 %v1705, 16
      %v1947 = vpop.permute.xlu0 %1946
      %1950 = vrot.lane.b32.xlu0 %v1708, 24
      %v1951 = vpop.permute.xlu0 %1950
      %1952 = vrot.lane.b32.xlu0 %v1710, 24
      %v1953 = vpop.permute.xlu0 %1952
      %1956 = vrot.lane.b32.xlu0 %v1713, 32
      %v1957 = vpop.permute.xlu0 %1956
      %1958 = vrot.lane.b32.xlu0 %v1715, 32
      %v1959 = vpop.permute.xlu0 %1958
      %1962 = vrot.lane.b32.xlu0 %v1718, 40
      %v1963 = vpop.permute.xlu0 %1962
      %1964 = vrot.lane.b32.xlu0 %v1720, 40
      %v1965 = vpop.permute.xlu0 %1964
      %1968 = vrot.lane.b32.xlu0 %v1723, 48
      %v1969 = vpop.permute.xlu0 %1968
      %1970 = vrot.lane.b32.xlu0 %v1725, 48
      %v1971 = vpop.permute.xlu0 %1970
      %1974 = vrot.lane.b32.xlu0 %v1728, 56
      %v1975 = vpop.permute.xlu0 %1974
      %1976 = vrot.lane.b32.xlu0 %v1730, 56
      %v1977 = vpop.permute.xlu0 %1976
      %1980 = vrot.lane.b32.xlu0 %v1733, 64
      %v1981 = vpop.permute.xlu0 %1980
      %1982 = vrot.lane.b32.xlu0 %v1735, 64
      %v1983 = vpop.permute.xlu0 %1982
      %1986 = vrot.lane.b32.xlu0 %v1738, 72
      %v1987 = vpop.permute.xlu0 %1986
      %1988 = vrot.lane.b32.xlu0 %v1740, 72
      %v1989 = vpop.permute.xlu0 %1988
      %1992 = vrot.lane.b32.xlu0 %v1743, 80
      %v1993 = vpop.permute.xlu0 %1992
      %1994 = vrot.lane.b32.xlu0 %v1745, 80
      %v1995 = vpop.permute.xlu0 %1994
      %1998 = vrot.lane.b32.xlu0 %v1748, 88
      %v1999 = vpop.permute.xlu0 %1998
      %2000 = vrot.lane.b32.xlu0 %v1750, 88
      %v2001 = vpop.permute.xlu0 %2000
      %2004 = vrot.lane.b32.xlu0 %v1753, 96
      %v2005 = vpop.permute.xlu0 %2004
      %2006 = vrot.lane.b32.xlu0 %v1755, 96
      %v2007 = vpop.permute.xlu0 %2006
      %2010 = vrot.lane.b32.xlu0 %v1758, 104
      %v2011 = vpop.permute.xlu0 %2010
      %2012 = vrot.lane.b32.xlu0 %v1760, 104
      %v2013 = vpop.permute.xlu0 %2012
      %2016 = vrot.lane.b32.xlu0 %v1763, 112
      %v2017 = vpop.permute.xlu0 %2016
      %2018 = vrot.lane.b32.xlu0 %v1765, 112
      %v2019 = vpop.permute.xlu0 %2018
      %v2022 = vsel %vm1354, %v1933, %v1693
      %v2023 = vsel %vm1354, %v1935, %v1695
      %v2024 = vsel %vm1420, %v2022, %v1939
      %v2025 = vsel %vm1420, %v2023, %v1941
      %v2026 = vsel %vm1486, %v2024, %v1945
      %v2027 = vsel %vm1486, %v2025, %v1947
      %v2028 = vsel %vm1552, %v2026, %v1951
      %v2029 = vsel %vm1552, %v2027, %v1953
      %v2030 = vsel %vm1895, %v2028, %v1957
      %v2031 = vsel %vm1895, %v2029, %v1959
      %v2032 = vsel %vm1898, %v2030, %v1963
      %v2033 = vsel %vm1898, %v2031, %v1965
      %v2034 = vsel %vm1901, %v2032, %v1969
      %v2035 = vsel %vm1901, %v2033, %v1971
      %v2036 = vsel %vm1904, %v2034, %v1975
      %v2037 = vsel %vm1904, %v2035, %v1977
      %v2038 = vsel %vm1907, %v2036, %v1981
      %v2039 = vsel %vm1907, %v2037, %v1983
      %v2040 = vsel %vm1910, %v2038, %v1987
      %v2041 = vsel %vm1910, %v2039, %v1989
      %v2042 = vsel %vm1913, %v2040, %v1993
      %v2043 = vsel %vm1913, %v2041, %v1995
      %v2044 = vsel %vm1916, %v2042, %v1999
      %v2045 = vsel %vm1916, %v2043, %v2001
      %v2046 = vsel %vm1919, %v2044, %v2005
      %v2047 = vsel %vm1919, %v2045, %v2007
      %v2048 = vsel %vm1922, %v2046, %v2011
      %v2049 = vsel %vm1922, %v2047, %v2013
      %v2050 = vsel %vm1925, %v2048, %v2017
      %v2051 = vsel %vm1925, %v2049, %v2019
      %s2052 = scalar_lea.vmem %s206, 16
      %2053 = vst [vmem:[%s2052] sm:$0xff] %v2050
      %2054 = vst [vmem:[%s2052 + $0x8] sm:$0xff] %v2051
      %2055 = vrot.lane.b32.xlu0 %v1688, 112
      %v2056 = vpop.permute.xlu0 %2055
      %2057 = vrot.lane.b32.xlu0 %v1690, 112
      %v2058 = vpop.permute.xlu0 %2057
      %2061 = vrot.lane.b32.xlu0 %v1693, 120
      %v2062 = vpop.permute.xlu0 %2061
      %2063 = vrot.lane.b32.xlu0 %v1695, 120
      %v2064 = vpop.permute.xlu0 %2063
      %2067 = vrot.lane.b32.xlu0 %v1703, 8
      %v2068 = vpop.permute.xlu0 %2067
      %2069 = vrot.lane.b32.xlu0 %v1705, 8
      %v2070 = vpop.permute.xlu0 %2069
      %2073 = vrot.lane.b32.xlu0 %v1708, 16
      %v2074 = vpop.permute.xlu0 %2073
      %2075 = vrot.lane.b32.xlu0 %v1710, 16
      %v2076 = vpop.permute.xlu0 %2075
      %2079 = vrot.lane.b32.xlu0 %v1713, 24
      %v2080 = vpop.permute.xlu0 %2079
      %2081 = vrot.lane.b32.xlu0 %v1715, 24
      %v2082 = vpop.permute.xlu0 %2081
      %2085 = vrot.lane.b32.xlu0 %v1718, 32
      %v2086 = vpop.permute.xlu0 %2085
      %2087 = vrot.lane.b32.xlu0 %v1720, 32
      %v2088 = vpop.permute.xlu0 %2087
      %2091 = vrot.lane.b32.xlu0 %v1723, 40
      %v2092 = vpop.permute.xlu0 %2091
      %2093 = vrot.lane.b32.xlu0 %v1725, 40
      %v2094 = vpop.permute.xlu0 %2093
      %2097 = vrot.lane.b32.xlu0 %v1728, 48
      %v2098 = vpop.permute.xlu0 %2097
      %2099 = vrot.lane.b32.xlu0 %v1730, 48
      %v2100 = vpop.permute.xlu0 %2099
      %2103 = vrot.lane.b32.xlu0 %v1733, 56
      %v2104 = vpop.permute.xlu0 %2103
      %2105 = vrot.lane.b32.xlu0 %v1735, 56
      %v2106 = vpop.permute.xlu0 %2105
      %2109 = vrot.lane.b32.xlu0 %v1738, 64
      %v2110 = vpop.permute.xlu0 %2109
      %2111 = vrot.lane.b32.xlu0 %v1740, 64
      %v2112 = vpop.permute.xlu0 %2111
      %2115 = vrot.lane.b32.xlu0 %v1743, 72
      %v2116 = vpop.permute.xlu0 %2115
      %2117 = vrot.lane.b32.xlu0 %v1745, 72
      %v2118 = vpop.permute.xlu0 %2117
      %2121 = vrot.lane.b32.xlu0 %v1748, 80
      %v2122 = vpop.permute.xlu0 %2121
      %2123 = vrot.lane.b32.xlu0 %v1750, 80
      %v2124 = vpop.permute.xlu0 %2123
      %2127 = vrot.lane.b32.xlu0 %v1753, 88
      %v2128 = vpop.permute.xlu0 %2127
      %2129 = vrot.lane.b32.xlu0 %v1755, 88
      %v2130 = vpop.permute.xlu0 %2129
      %2133 = vrot.lane.b32.xlu0 %v1758, 96
      %v2134 = vpop.permute.xlu0 %2133
      %2135 = vrot.lane.b32.xlu0 %v1760, 96
      %v2136 = vpop.permute.xlu0 %2135
      %2139 = vrot.lane.b32.xlu0 %v1763, 104
      %v2140 = vpop.permute.xlu0 %2139
      %2141 = vrot.lane.b32.xlu0 %v1765, 104
      %v2142 = vpop.permute.xlu0 %2141
      %v2145 = vsel %vm1354, %v2056, %v2062
      %v2146 = vsel %vm1354, %v2058, %v2064
      %v2147 = vsel %vm1420, %v2145, %v1698
      %v2148 = vsel %vm1420, %v2146, %v1700
      %v2149 = vsel %vm1486, %v2147, %v2068
      %v2150 = vsel %vm1486, %v2148, %v2070
      %v2151 = vsel %vm1552, %v2149, %v2074
      %v2152 = vsel %vm1552, %v2150, %v2076
      %v2153 = vsel %vm1895, %v2151, %v2080
      %v2154 = vsel %vm1895, %v2152, %v2082
      %v2155 = vsel %vm1898, %v2153, %v2086
      %v2156 = vsel %vm1898, %v2154, %v2088
      %v2157 = vsel %vm1901, %v2155, %v2092
      %v2158 = vsel %vm1901, %v2156, %v2094
      %v2159 = vsel %vm1904, %v2157, %v2098
      %v2160 = vsel %vm1904, %v2158, %v2100
      %v2161 = vsel %vm1907, %v2159, %v2104
      %v2162 = vsel %vm1907, %v2160, %v2106
      %v2163 = vsel %vm1910, %v2161, %v2110
      %v2164 = vsel %vm1910, %v2162, %v2112
      %v2165 = vsel %vm1913, %v2163, %v2116
      %v2166 = vsel %vm1913, %v2164, %v2118
      %v2167 = vsel %vm1916, %v2165, %v2122
      %v2168 = vsel %vm1916, %v2166, %v2124
      %v2169 = vsel %vm1919, %v2167, %v2128
      %v2170 = vsel %vm1919, %v2168, %v2130
      %v2171 = vsel %vm1922, %v2169, %v2134
      %v2172 = vsel %vm1922, %v2170, %v2136
      %v2173 = vsel %vm1925, %v2171, %v2140
      %v2174 = vsel %vm1925, %v2172, %v2142
      %s2175 = scalar_lea.vmem %s206, 32
      %2176 = vst [vmem:[%s2175] sm:$0xff] %v2173
      %2177 = vst [vmem:[%s2175 + $0x8] sm:$0xff] %v2174
      %2178 = vrot.lane.b32.xlu0 %v1688, 104
      %v2179 = vpop.permute.xlu0 %2178
      %2180 = vrot.lane.b32.xlu0 %v1690, 104
      %v2181 = vpop.permute.xlu0 %2180
      %2184 = vrot.lane.b32.xlu0 %v1693, 112
      %v2185 = vpop.permute.xlu0 %2184
      %2186 = vrot.lane.b32.xlu0 %v1695, 112
      %v2187 = vpop.permute.xlu0 %2186
      %2190 = vrot.lane.b32.xlu0 %v1698, 120
      %v2191 = vpop.permute.xlu0 %2190
      %2192 = vrot.lane.b32.xlu0 %v1700, 120
      %v2193 = vpop.permute.xlu0 %2192
      %2196 = vrot.lane.b32.xlu0 %v1708, 8
      %v2197 = vpop.permute.xlu0 %2196
      %2198 = vrot.lane.b32.xlu0 %v1710, 8
      %v2199 = vpop.permute.xlu0 %2198
      %2202 = vrot.lane.b32.xlu0 %v1713, 16
      %v2203 = vpop.permute.xlu0 %2202
      %2204 = vrot.lane.b32.xlu0 %v1715, 16
      %v2205 = vpop.permute.xlu0 %2204
      %2208 = vrot.lane.b32.xlu0 %v1718, 24
      %v2209 = vpop.permute.xlu0 %2208
      %2210 = vrot.lane.b32.xlu0 %v1720, 24
      %v2211 = vpop.permute.xlu0 %2210
      %2214 = vrot.lane.b32.xlu0 %v1723, 32
      %v2215 = vpop.permute.xlu0 %2214
      %2216 = vrot.lane.b32.xlu0 %v1725, 32
      %v2217 = vpop.permute.xlu0 %2216
      %2220 = vrot.lane.b32.xlu0 %v1728, 40
      %v2221 = vpop.permute.xlu0 %2220
      %2222 = vrot.lane.b32.xlu0 %v1730, 40
      %v2223 = vpop.permute.xlu0 %2222
      %2226 = vrot.lane.b32.xlu0 %v1733, 48
      %v2227 = vpop.permute.xlu0 %2226
      %2228 = vrot.lane.b32.xlu0 %v1735, 48
      %v2229 = vpop.permute.xlu0 %2228
      %2232 = vrot.lane.b32.xlu0 %v1738, 56
      %v2233 = vpop.permute.xlu0 %2232
      %2234 = vrot.lane.b32.xlu0 %v1740, 56
      %v2235 = vpop.permute.xlu0 %2234
      %2238 = vrot.lane.b32.xlu0 %v1743, 64
      %v2239 = vpop.permute.xlu0 %2238
      %2240 = vrot.lane.b32.xlu0 %v1745, 64
      %v2241 = vpop.permute.xlu0 %2240
      %2244 = vrot.lane.b32.xlu0 %v1748, 72
      %v2245 = vpop.permute.xlu0 %2244
      %2246 = vrot.lane.b32.xlu0 %v1750, 72
      %v2247 = vpop.permute.xlu0 %2246
      %2250 = vrot.lane.b32.xlu0 %v1753, 80
      %v2251 = vpop.permute.xlu0 %2250
      %2252 = vrot.lane.b32.xlu0 %v1755, 80
      %v2253 = vpop.permute.xlu0 %2252
      %2256 = vrot.lane.b32.xlu0 %v1758, 88
      %v2257 = vpop.permute.xlu0 %2256
      %2258 = vrot.lane.b32.xlu0 %v1760, 88
      %v2259 = vpop.permute.xlu0 %2258
      %2262 = vrot.lane.b32.xlu0 %v1763, 96
      %v2263 = vpop.permute.xlu0 %2262
      %2264 = vrot.lane.b32.xlu0 %v1765, 96
      %v2265 = vpop.permute.xlu0 %2264
      %v2268 = vsel %vm1354, %v2179, %v2185
      %v2269 = vsel %vm1354, %v2181, %v2187
      %v2270 = vsel %vm1420, %v2268, %v2191
      %v2271 = vsel %vm1420, %v2269, %v2193
      %v2272 = vsel %vm1486, %v2270, %v1703
      %v2273 = vsel %vm1486, %v2271, %v1705
      %v2274 = vsel %vm1552, %v2272, %v2197
      %v2275 = vsel %vm1552, %v2273, %v2199
      %v2276 = vsel %vm1895, %v2274, %v2203
      %v2277 = vsel %vm1895, %v2275, %v2205
      %v2278 = vsel %vm1898, %v2276, %v2209
      %v2279 = vsel %vm1898, %v2277, %v2211
      %v2280 = vsel %vm1901, %v2278, %v2215
      %v2281 = vsel %vm1901, %v2279, %v2217
      %v2282 = vsel %vm1904, %v2280, %v2221
      %v2283 = vsel %vm1904, %v2281, %v2223
      %v2284 = vsel %vm1907, %v2282, %v2227
      %v2285 = vsel %vm1907, %v2283, %v2229
      %v2286 = vsel %vm1910, %v2284, %v2233
      %v2287 = vsel %vm1910, %v2285, %v2235
      %v2288 = vsel %vm1913, %v2286, %v2239
      %v2289 = vsel %vm1913, %v2287, %v2241
      %v2290 = vsel %vm1916, %v2288, %v2245
      %v2291 = vsel %vm1916, %v2289, %v2247
      %v2292 = vsel %vm1919, %v2290, %v2251
      %v2293 = vsel %vm1919, %v2291, %v2253
      %v2294 = vsel %vm1922, %v2292, %v2257
      %v2295 = vsel %vm1922, %v2293, %v2259
      %v2296 = vsel %vm1925, %v2294, %v2263
      %v2297 = vsel %vm1925, %v2295, %v2265
      %s2298 = scalar_lea.vmem %s206, 48
      %2299 = vst [vmem:[%s2298] sm:$0xff] %v2296
      %2300 = vst [vmem:[%s2298 + $0x8] sm:$0xff] %v2297
      %s2301 = smul.u32 2, %s19
      %p2302 = scmp.lt.s32.totalorder %s18, 1
      %s2303 = scalar_select %p2302, %s18, 1
      %p2304 = scmp.lt.s32.totalorder %s2301, 1
      %s2305 = scalar_select %p2304, %s2301, 1
      %s2306 = smul.addr %s2303, 8
      %s2307 = sadd.s32 %s2305, %s2306
      %s2308 = smul.addr %s2307, 8
      %s2309 = scalar_lea.vmem %s3, %s2308
      // Predicated region
      $region33: #{block_up_forward.1} parent=31 // pred_check
        %p2310 = pneg %p116
      $region34: #{block_up_forward.1} parent=31 // pred_check_branch
        %2312 = sbr.rel (%p2310) target = $region36
      $region35: #{block_up_forward.1} parent=31 // pred_region
        %s2313 = smul.u32 2, %s19
      $region36: #{block_up_forward.1} parent=31 // pred_fallthru
        _
    $region32: #{block_up_forward.1} parent=5 // pred_fallthru
      _
    %p2314 = scmp.le.s32.totalorder 2, %s9
    // Predicated region
    $region37: #{block_up_forward.1} parent=5 // pred_check
      %p2315 = pneg %p2314
    $region38: #{block_up_forward.1} parent=5 // pred_check_branch
      %2317 = sbr.rel (%p2315) target = $region40
    $region39: #{block_up_forward.1} parent=5 // pred_region
      %s2318 = ssub.s32 %s9, 2
      // Predicated region
      $region41: #{block_up_forward.1} parent=39 // pred_check
        %p2319 = pneg %p122
      $region42: #{block_up_forward.1} parent=39 // pred_check_branch
        %2321 = sbr.rel (%p2319) target = $region44
      $region43: #{block_up_forward.1} parent=39 // pred_region
        %s2322 = smul.u32 2, %s21
        %p2323 = scmp.lt.s32.totalorder %s20, 1
        %s2324 = scalar_select %p2323, %s20, 1
        %p2325 = scmp.lt.s32.totalorder %s2322, 1
        %s2326 = scalar_select %p2325, %s2322, 1
        %s2327 = smul.addr %s2324, 8
        %s2328 = sadd.s32 %s2326, %s2327
        %s2329 = smul.addr %s2328, 8
        %s2330 = scalar_lea.vmem %s3, %s2329
      $region44: #{block_up_forward.1} parent=39 // pred_fallthru
        _
    $region40: #{block_up_forward.1} parent=5 // pred_fallthru
      _
  $region6: #{block_up_forward.1} parent=0 // loop_footer
    %s13 = sadd.s32 1, %s9
  $region7: #{block_up_forward.1} parent=0 // loop_footer_branch
    %8 = sbr.rel target = $region3
  $region8: #{block_up_forward.1} parent=0 // loop_exit
    _

</llo_original>
